<compile_context>
chip_gen: v5e
topology: v5e:2x2
jax: 0.10.0
libtpu: 0.0.40
codegen_flags: <defaults>
</compile_context>

<pallas_src>
import math
from functools import partial

import jax
import jax.numpy as jnp
from jax.experimental import pallas as pl
from jax.experimental.pallas import tpu as pltpu


# ---------------------------------------------------------------------------
# Kernel 1: stacked/batched linear projection  y[s] = x[s] @ W[s] + b[s]
#   x: (n_stack, M, D_in)  W: (n_stack, D_in, D_out)  b: (n_stack, 1, D_out)
# Matmul operands in bf16, f32 accumulation, bias added in f32.
# ---------------------------------------------------------------------------
def _linear_kernel(x_ref, w_ref, b_ref, o_ref):
    x = x_ref[...].astype(jnp.bfloat16)
    w = w_ref[...].astype(jnp.bfloat16)
    acc = jnp.dot(x, w, preferred_element_type=jnp.float32)
    o_ref[...] = (acc + b_ref[...]).astype(o_ref.dtype)


def _stacked_linear(x, w, b, *, out_dtype=jnp.float32, tm=256, tn=512):
    n_stack, M, D_in = x.shape
    _, _, D_out = w.shape
    tm = min(tm, M)
    tn = min(tn, D_out)
    assert M % tm == 0 and D_out % tn == 0, "demo tiling requires even division"

    sq = pl.Squeezed()
    grid = (n_stack, M // tm, D_out // tn)
    return pl.pallas_call(
        _linear_kernel,
        out_shape=jax.ShapeDtypeStruct((n_stack, M, D_out), out_dtype),
        grid=grid,
        in_specs=[
            pl.BlockSpec((sq, tm, D_in), lambda s, i, j: (s, i, 0)),
            pl.BlockSpec((sq, D_in, tn), lambda s, i, j: (s, 0, j)),
            pl.BlockSpec((sq, 1, tn), lambda s, i, j: (s, 0, j)),
        ],
        out_specs=pl.BlockSpec((sq, tm, tn), lambda s, i, j: (s, i, j)),
        compiler_params=pltpu.CompilerParams(
            dimension_semantics=("parallel", "parallel", "parallel")),
    )(x, w, b)


# ---------------------------------------------------------------------------
# Kernel 2: flash attention (online softmax over KV tiles), mask=None path.
#   q, k, v: (B*H, S, d_k) -> o: (B*H, S, d_k)
# A whole head-batch slab of size tbh is processed per grid step (batched
# einsum on the MXU), with the KV axis as the last ("arbitrary") grid axis.
# ---------------------------------------------------------------------------
def _make_flash_kernel(scale: float):
    def flash_kernel(q_ref, k_ref, v_ref, o_ref, m_sc, l_sc, acc_sc):
        ki = pl.program_id(2)

        @pl.when(ki == 0)
        def _():
            m_sc[...] = jnp.full(m_sc.shape, -jnp.inf, m_sc.dtype)
            l_sc[...] = jnp.zeros(l_sc.shape, l_sc.dtype)
            acc_sc[...] = jnp.zeros(acc_sc.shape, acc_sc.dtype)

        # Fold the 1/sqrt(d_k) scale into the small Q tile (tq*d_k muls)
        # rather than the (tq*tk) score matrix.
        q = q_ref[...].astype(jnp.bfloat16) * scale   # (tbh, tq, d_k)
        k = k_ref[...].astype(jnp.bfloat16)           # (tbh, tk, d_k)
        v = v_ref[...].astype(jnp.bfloat16)           # (tbh, tk, d_k)

        # Q @ K^T with the last dims contracted (no explicit transpose).
        s = jnp.einsum("bqd,bkd->bqk", q, k,
                       preferred_element_type=jnp.float32)   # (tbh, tq, tk) f32

        # TODO(synk): optional attention `mask` (masked_fill with -inf) is not
        # plumbed through; this kernel implements the mask=None path.

        m_prev = m_sc[...]
        m_new = jnp.maximum(m_prev, s.max(axis=-1, keepdims=True))
        alpha = jnp.exp(m_prev - m_new)
        p = jnp.exp(s - m_new)                                # f32 softmax math
        l_sc[...] = alpha * l_sc[...] + p.sum(axis=-1, keepdims=True)
        acc_sc[...] = alpha * acc_sc[...] + jnp.einsum(
            "bqk,bkd->bqd", p.astype(jnp.bfloat16), v,
            preferred_element_type=jnp.float32)
        m_sc[...] = m_new

        @pl.when(ki == pl.num_programs(2) - 1)
        def _():
            inv_l = pl.reciprocal(l_sc[...], approx=True)     # EUP slot
            o_ref[...] = (acc_sc[...] * inv_l).astype(o_ref.dtype)

    return flash_kernel


def _flash_attention(q, k, v, *, tq=128, tk=256, tbh=8):
    BH, S, d_k = q.shape
    tq = min(tq, S)
    tk = min(tk, S)
    tbh = min(tbh, BH)
    assert S % tq == 0 and S % tk == 0 and BH % tbh == 0, (
        "demo tiling requires even division")
    scale = 1.0 / math.sqrt(float(d_k))

    grid = (BH // tbh, S // tq, S // tk)
    return pl.pallas_call(
        _make_flash_kernel(scale),
        out_shape=jax.ShapeDtypeStruct((BH, S, d_k), q.dtype),
        grid=grid,
        in_specs=[
            pl.BlockSpec((tbh, tq, d_k), lambda b, qi, ki: (b, qi, 0)),
            pl.BlockSpec((tbh, tk, d_k), lambda b, qi, ki: (b, ki, 0)),
            pl.BlockSpec((tbh, tk, d_k), lambda b, qi, ki: (b, ki, 0)),
        ],
        out_specs=pl.BlockSpec((tbh, tq, d_k), lambda b, qi, ki: (b, qi, 0)),
        scratch_shapes=[
            pltpu.VMEM((tbh, tq, 1), jnp.float32),     # running max
            pltpu.VMEM((tbh, tq, 1), jnp.float32),     # running sum
            pltpu.VMEM((tbh, tq, d_k), jnp.float32),   # running output acc
        ],
        compiler_params=pltpu.CompilerParams(
            dimension_semantics=("parallel", "parallel", "arbitrary")),
    )(q, k, v)


# ---------------------------------------------------------------------------
# Full multi-head attention forward (mask=None path of the PyTorch module).
# ---------------------------------------------------------------------------
@partial(jax.jit, static_argnames=("num_heads",))
def multi_head_attention(query, key, value, params, *, num_heads: int):
    """query/key/value: (B, S, D) float32. params: dict of W/b arrays."""
    B, S, D = query.shape
    assert D % num_heads == 0
    d_k = D // num_heads

    # Fused Q/K/V projection: one pallas_call, grid over the stacked weights.
    x = jnp.stack([query.reshape(B * S, D),
                   key.reshape(B * S, D),
                   value.reshape(B * S, D)], axis=0)              # (3, B*S, D)
    w_qkv = jnp.stack([params["W_q"], params["W_k"], params["W_v"]], axis=0)
    b_qkv = jnp.stack([params["b_q"], params["b_k"], params["b_v"]], axis=0)
    qkv = _stacked_linear(x, w_qkv, b_qkv, out_dtype=jnp.bfloat16)  # bf16

    # Wrapper-level layout plumbing (bf16 -> half the bytes moved):
    # split heads and fold heads into the batch axis -> (B*H, S, d_k).
    qkv = qkv.reshape(3, B, S, num_heads, d_k).transpose(0, 1, 3, 2, 4)
    q_h = qkv[0].reshape(B * num_heads, S, d_k)
    k_h = qkv[1].reshape(B * num_heads, S, d_k)
    v_h = qkv[2].reshape(B * num_heads, S, d_k)

    attn = _flash_attention(q_h, k_h, v_h)                        # (B*H, S, d_k)

    # Merge heads (layout plumbing) and apply the output projection kernel.
    merged = (attn.reshape(B, num_heads, S, d_k)
                  .transpose(0, 2, 1, 3)
                  .reshape(1, B * S, D))                          # bf16
    out = _stacked_linear(merged, params["W_o"][None], params["b_o"][None],
                          out_dtype=jnp.float32)
    return out.reshape(B, S, D)


# ---------------------------------------------------------------------------
# Pure-JAX reference mirroring the PyTorch forward (mask=None), f32 throughout.
# ---------------------------------------------------------------------------
def _reference_mha(query, key, value, params, *, num_heads: int):
    B, S, D = query.shape
    d_k = D // num_heads

    def lin(x, w, b):
        return x @ w + b

    def split_heads(x):  # (B, S, D) -> (B, H, S, d_k)
        return x.reshape(B, S, num_heads, d_k).transpose(0, 2, 1, 3)

    Q = split_heads(lin(query, params["W_q"], params["b_q"]))
    K = split_heads(lin(key, params["W_k"], params["b_k"]))
    V = split_heads(lin(value, params["W_v"], params["b_v"]))

    scores = jnp.einsum("bhqd,bhkd->bhqk", Q, K) / math.sqrt(d_k)
    attn = jax.nn.softmax(scores, axis=-1)
    out = jnp.einsum("bhqk,bhkd->bhqd", attn, V)
    out = out.transpose(0, 2, 1, 3).reshape(B, S, D)
    return lin(out, params["W_o"], params["b_o"])


def init_params(key, d_model: int):
    """Deterministic init; shapes match nn.Linear(d_model, d_model) in (in,out)."""
    keys = jax.random.split(key, 8)
    bound = 1.0 / math.sqrt(d_model)

    def w(k):
        return jax.random.uniform(k, (d_model, d_model), jnp.float32, -bound, bound)

    def b(k):
        # stored as (1, d_model) for TPU-friendly 2D layout
        return jax.random.uniform(k, (1, d_model), jnp.float32, -bound, bound)

    return {
        "W_q": w(keys[0]), "b_q": b(keys[1]),
        "W_k": w(keys[2]), "b_k": b(keys[3]),
        "W_v": w(keys[4]), "b_v": b(keys[5]),
        "W_o": w(keys[6]), "b_o": b(keys[7]),
    }


if __name__ == "__main__":
    B, S, d_model, num_heads = 2, 8, 32, 4

    root = jax.random.PRNGKey(0)
    k_params, k_q, k_k, k_v = jax.random.split(root, 4)

    params = init_params(k_params, d_model)
    query = jax.random.normal(k_q, (B, S, d_model), jnp.float32)
    key_ = jax.random.normal(k_k, (B, S, d_model), jnp.float32)
    value = jax.random.normal(k_v, (B, S, d_model), jnp.float32)

    out = multi_head_attention(query, key_, value, params, num_heads=num_heads)
    out = jax.block_until_ready(out)

    ref = _reference_mha(query, key_, value, params, num_heads=num_heads)
    assert out.shape == (B, S, d_model)
    # bf16 matmul operands / intermediates + approx reciprocal -> looser tol.
    assert jnp.allclose(out, ref, atol=3e-2, rtol=3e-2), (
        "Pallas output mismatch vs reference: max abs err = "
        f"{float(jnp.max(jnp.abs(out - ref)))}")

    print("KERNEL_OK")
</pallas_src>

<mosaic_0001>
module attributes {stable_mosaic.version = 11 : i64} {
  func.func @_linear_kernel(%arg0: i32, %arg1: i32, %arg2: i32, %arg3: memref<1x16x32xf32, #tpu.memory_space<vmem>>, %arg4: memref<1x32x32xf32, #tpu.memory_space<vmem>>, %arg5: memref<1x1x32xf32, #tpu.memory_space<vmem>>, %arg6: memref<1x16x32xbf16, #tpu.memory_space<vmem>>) attributes {dimension_semantics = [#tpu.dimension_semantics<parallel>, #tpu.dimension_semantics<parallel>, #tpu.dimension_semantics<parallel>], iteration_bounds = array<i64: 3, 1, 1>, scalar_prefetch = 0 : i64, scratch_operands = 0 : i64, tpu.core_type = #tpu.core_type<tc>, window_params = [{transform_indices = @transform_0, window_bounds = array<i64: 1, 16, 32>}, {transform_indices = @transform_1, window_bounds = array<i64: 1, 32, 32>}, {transform_indices = @transform_2, window_bounds = array<i64: 1, 1, 32>}, {transform_indices = @transform_3, window_bounds = array<i64: 1, 16, 32>}]} {
    %c0 = arith.constant 0 : index
    %c0_0 = arith.constant 0 : index
    %c0_1 = arith.constant 0 : index
    %0 = vector.load %arg3[%c0, %c0_0, %c0_1] : memref<1x16x32xf32, #tpu.memory_space<vmem>>, vector<1x16x32xf32>
    %1 = vector.shape_cast %0 : vector<1x16x32xf32> to vector<16x32xf32>
    %2 = arith.truncf %1 : vector<16x32xf32> to vector<16x32xbf16>
    %c0_2 = arith.constant 0 : index
    %c0_3 = arith.constant 0 : index
    %c0_4 = arith.constant 0 : index
    %3 = vector.load %arg4[%c0_2, %c0_3, %c0_4] : memref<1x32x32xf32, #tpu.memory_space<vmem>>, vector<1x32x32xf32>
    %4 = vector.shape_cast %3 : vector<1x32x32xf32> to vector<32x32xf32>
    %5 = arith.truncf %4 : vector<32x32xf32> to vector<32x32xbf16>
    %cst = arith.constant dense<0.000000e+00> : vector<16x32xf32>
    %6 = tpu.matmul %2, %5, %cst {dimension_numbers = #tpu.dot_dimension_numbers<[1], [0], [0], [1], [0, 0, 1, 1], [], []>} : vector<16x32xbf16>, vector<32x32xbf16>, vector<16x32xf32> -> vector<16x32xf32>
    %c0_5 = arith.constant 0 : index
    %c0_6 = arith.constant 0 : index
    %c0_7 = arith.constant 0 : index
    %7 = vector.load %arg5[%c0_5, %c0_6, %c0_7] : memref<1x1x32xf32, #tpu.memory_space<vmem>>, vector<1x1x32xf32>
    %8 = vector.shape_cast %7 : vector<1x1x32xf32> to vector<1x32xf32>
    %9 = vector.broadcast %8 : vector<1x32xf32> to vector<16x32xf32>
    %10 = arith.addf %6, %9 : vector<16x32xf32>
    %11 = arith.truncf %10 : vector<16x32xf32> to vector<16x32xbf16>
    %c0_8 = arith.constant 0 : index
    %c0_9 = arith.constant 0 : index
    %c0_10 = arith.constant 0 : index
    %12 = vector.load %arg6[%c0_8, %c0_9, %c0_10] : memref<1x16x32xbf16, #tpu.memory_space<vmem>>, vector<1x16x32xbf16>
    %13 = vector.shape_cast %12 : vector<1x16x32xbf16> to vector<16x32xbf16>
    %14 = vector.shape_cast %11 : vector<16x32xbf16> to vector<1x16x32xbf16>
    tpu.vector_store %arg6[%c0_8, %c0_9, %c0_10], %14 {strides = array<i32>} : memref<1x16x32xbf16, #tpu.memory_space<vmem>>, vector<1x16x32xbf16>,
    return
  }
  func.func @transform_0(%arg0: i32, %arg1: i32, %arg2: i32) -> (i32, i32, i32) {
    %c0_i32 = arith.constant 0 : i32
    %c0_i32_0 = arith.constant 0 : i32
    return %arg0, %arg1, %c0_i32 : i32, i32, i32
  }
  func.func @transform_1(%arg0: i32, %arg1: i32, %arg2: i32) -> (i32, i32, i32) {
    %c0_i32 = arith.constant 0 : i32
    %c0_i32_0 = arith.constant 0 : i32
    return %arg0, %c0_i32, %arg2 : i32, i32, i32
  }
  func.func @transform_2(%arg0: i32, %arg1: i32, %arg2: i32) -> (i32, i32, i32) {
    %c0_i32 = arith.constant 0 : i32
    %c0_i32_0 = arith.constant 0 : i32
    return %arg0, %c0_i32, %arg2 : i32, i32, i32
  }
  func.func @transform_3(%arg0: i32, %arg1: i32, %arg2: i32) -> (i32, i32, i32) {
    %c0_i32 = arith.constant 0 : i32
    return %arg0, %arg1, %arg2 : i32, i32, i32
  }
}

module attributes {stable_mosaic.version = 11 : i64} {
  func.func @flash_kernel(%arg0: i32, %arg1: i32, %arg2: i32, %arg3: memref<8x8x8xbf16, #tpu.memory_space<vmem>>, %arg4: memref<8x8x8xbf16, #tpu.memory_space<vmem>>, %arg5: memref<8x8x8xbf16, #tpu.memory_space<vmem>>, %arg6: memref<8x8x8xbf16, #tpu.memory_space<vmem>>, %arg7: memref<8x8x1xf32, #tpu.memory_space<vmem>>, %arg8: memref<8x8x1xf32, #tpu.memory_space<vmem>>, %arg9: memref<8x8x8xf32, #tpu.memory_space<vmem>>) attributes {dimension_semantics = [#tpu.dimension_semantics<parallel>, #tpu.dimension_semantics<parallel>, #tpu.dimension_semantics<arbitrary>], iteration_bounds = array<i64: 1, 1, 1>, scalar_prefetch = 0 : i64, scratch_operands = 3 : i64, tpu.core_type = #tpu.core_type<tc>, window_params = [{transform_indices = @transform_0, window_bounds = array<i64: 8, 8, 8>}, {transform_indices = @transform_1, window_bounds = array<i64: 8, 8, 8>}, {transform_indices = @transform_2, window_bounds = array<i64: 8, 8, 8>}, {transform_indices = @transform_3, window_bounds = array<i64: 8, 8, 8>}]} {
    %c0_i32 = arith.constant 0 : i32
    %0 = arith.cmpi eq, %arg2, %c0_i32 : i32
    %1 = arith.extui %0 : i1 to i32
    %c0_i32_0 = arith.constant 0 : i32
    %2 = arith.cmpi ne, %1, %c0_i32_0 : i32
    scf.if %2 {
      %cst_33 = arith.constant 0xFF800000 : f32
      %35 = vector.broadcast %cst_33 : f32 to vector<8x8x1xf32>
      %c0_34 = arith.constant 0 : index
      %c0_35 = arith.constant 0 : index
      %c0_36 = arith.constant 0 : index
      %36 = vector.load %arg7[%c0_34, %c0_35, %c0_36] : memref<8x8x1xf32, #tpu.memory_space<vmem>>, vector<8x8x1xf32>
      tpu.vector_store %arg7[%c0_34, %c0_35, %c0_36], %35 {strides = array<i32>} : memref<8x8x1xf32, #tpu.memory_space<vmem>>, vector<8x8x1xf32>,
      %cst_37 = arith.constant 0.000000e+00 : f32
      %37 = vector.broadcast %cst_37 : f32 to vector<8x8x1xf32>
      %c0_38 = arith.constant 0 : index
      %c0_39 = arith.constant 0 : index
      %c0_40 = arith.constant 0 : index
      %38 = vector.load %arg8[%c0_38, %c0_39, %c0_40] : memref<8x8x1xf32, #tpu.memory_space<vmem>>, vector<8x8x1xf32>
      tpu.vector_store %arg8[%c0_38, %c0_39, %c0_40], %37 {strides = array<i32>} : memref<8x8x1xf32, #tpu.memory_space<vmem>>, vector<8x8x1xf32>,
      %cst_41 = arith.constant 0.000000e+00 : f32
      %39 = vector.broadcast %cst_41 : f32 to vector<8x8x8xf32>
      %c0_42 = arith.constant 0 : index
      %c0_43 = arith.constant 0 : index
      %c0_44 = arith.constant 0 : index
      %40 = vector.load %arg9[%c0_42, %c0_43, %c0_44] : memref<8x8x8xf32, #tpu.memory_space<vmem>>, vector<8x8x8xf32>
      tpu.vector_store %arg9[%c0_42, %c0_43, %c0_44], %39 {strides = array<i32>} : memref<8x8x8xf32, #tpu.memory_space<vmem>>, vector<8x8x8xf32>,
    } else {
    }
    %c0 = arith.constant 0 : index
    %c0_1 = arith.constant 0 : index
    %c0_2 = arith.constant 0 : index
    %3 = vector.load %arg3[%c0, %c0_1, %c0_2] : memref<8x8x8xbf16, #tpu.memory_space<vmem>>, vector<8x8x8xbf16>
    %cst = arith.constant 3.535160e-01 : bf16
    %4 = vector.broadcast %cst : bf16 to vector<8x8x8xbf16>
    %5 = arith.mulf %3, %4 : vector<8x8x8xbf16>
    %c0_3 = arith.constant 0 : index
    %c0_4 = arith.constant 0 : index
    %c0_5 = arith.constant 0 : index
    %6 = vector.load %arg4[%c0_3, %c0_4, %c0_5] : memref<8x8x8xbf16, #tpu.memory_space<vmem>>, vector<8x8x8xbf16>
    %c0_6 = arith.constant 0 : index
    %c0_7 = arith.constant 0 : index
    %c0_8 = arith.constant 0 : index
    %7 = vector.load %arg5[%c0_6, %c0_7, %c0_8] : memref<8x8x8xbf16, #tpu.memory_space<vmem>>, vector<8x8x8xbf16>
    "tpu.trace_start"() <{level = 10 : i32, message = "bqd,bkd->bqk"}> : () -> ()
    %cst_9 = arith.constant dense<0.000000e+00> : vector<8x8x8xf32>
    %8 = tpu.matmul %5, %6, %cst_9 {dimension_numbers = #tpu.dot_dimension_numbers<[2], [2], [1], [1], [0, 0, 0, 1, 1, 1], [0], [0]>} : vector<8x8x8xbf16>, vector<8x8x8xbf16>, vector<8x8x8xf32> -> vector<8x8x8xf32>
    "tpu.trace_stop"() : () -> ()
    %c0_10 = arith.constant 0 : index
    %c0_11 = arith.constant 0 : index
    %c0_12 = arith.constant 0 : index
    %9 = vector.load %arg7[%c0_10, %c0_11, %c0_12] : memref<8x8x1xf32, #tpu.memory_space<vmem>>, vector<8x8x1xf32>
    %cst_13 = arith.constant dense<0xFF800000> : vector<8x8xf32>
    %10 = vector.multi_reduction <maximumf>, %8, %cst_13 [2] : vector<8x8x8xf32> to vector<8x8xf32>
    %11 = vector.shape_cast %10 : vector<8x8xf32> to vector<8x8x1xf32>
    %12 = arith.maximumf %9, %11 : vector<8x8x1xf32>
    %13 = arith.subf %9, %12 : vector<8x8x1xf32>
    %14 = math.exp %13 : vector<8x8x1xf32>
    %15 = vector.broadcast %12 : vector<8x8x1xf32> to vector<8x8x8xf32>
    %16 = arith.subf %8, %15 : vector<8x8x8xf32>
    %17 = math.exp %16 : vector<8x8x8xf32>
    %c0_14 = arith.constant 0 : index
    %c0_15 = arith.constant 0 : index
    %c0_16 = arith.constant 0 : index
    %18 = vector.load %arg8[%c0_14, %c0_15, %c0_16] : memref<8x8x1xf32, #tpu.memory_space<vmem>>, vector<8x8x1xf32>
    %19 = arith.mulf %14, %18 : vector<8x8x1xf32>
    %cst_17 = arith.constant dense<0.000000e+00> : vector<8x8xf32>
    %20 = vector.multi_reduction <add>, %17, %cst_17 [2] : vector<8x8x8xf32> to vector<8x8xf32>
    %21 = vector.shape_cast %20 : vector<8x8xf32> to vector<8x8x1xf32>
    %22 = arith.addf %19, %21 : vector<8x8x1xf32>
    %c0_18 = arith.constant 0 : index
    %c0_19 = arith.constant 0 : index
    %c0_20 = arith.constant 0 : index
    %23 = vector.load %arg8[%c0_18, %c0_19, %c0_20] : memref<8x8x1xf32, #tpu.memory_space<vmem>>, vector<8x8x1xf32>
    tpu.vector_store %arg8[%c0_18, %c0_19, %c0_20], %22 {strides = array<i32>} : memref<8x8x1xf32, #tpu.memory_space<vmem>>, vector<8x8x1xf32>,
    %c0_21 = arith.constant 0 : index
    %c0_22 = arith.constant 0 : index
    %c0_23 = arith.constant 0 : index
    %24 = vector.load %arg9[%c0_21, %c0_22, %c0_23] : memref<8x8x8xf32, #tpu.memory_space<vmem>>, vector<8x8x8xf32>
    %25 = vector.broadcast %14 : vector<8x8x1xf32> to vector<8x8x8xf32>
    %26 = arith.mulf %25, %24 : vector<8x8x8xf32>
    %27 = arith.truncf %17 : vector<8x8x8xf32> to vector<8x8x8xbf16>
    "tpu.trace_start"() <{level = 10 : i32, message = "bqk,bkd->bqd"}> : () -> ()
    %cst_24 = arith.constant dense<0.000000e+00> : vector<8x8x8xf32>
    %28 = tpu.matmul %27, %7, %cst_24 {dimension_numbers = #tpu.dot_dimension_numbers<[2], [1], [1], [2], [0, 0, 0, 1, 1, 2], [0], [0]>} : vector<8x8x8xbf16>, vector<8x8x8xbf16>, vector<8x8x8xf32> -> vector<8x8x8xf32>
    "tpu.trace_stop"() : () -> ()
    %29 = arith.addf %26, %28 : vector<8x8x8xf32>
    %c0_25 = arith.constant 0 : index
    %c0_26 = arith.constant 0 : index
    %c0_27 = arith.constant 0 : index
    %30 = vector.load %arg9[%c0_25, %c0_26, %c0_27] : memref<8x8x8xf32, #tpu.memory_space<vmem>>, vector<8x8x8xf32>
    tpu.vector_store %arg9[%c0_25, %c0_26, %c0_27], %29 {strides = array<i32>} : memref<8x8x8xf32, #tpu.memory_space<vmem>>, vector<8x8x8xf32>,
    %c0_28 = arith.constant 0 : index
    %c0_29 = arith.constant 0 : index
    %c0_30 = arith.constant 0 : index
    %31 = vector.load %arg7[%c0_28, %c0_29, %c0_30] : memref<8x8x1xf32, #tpu.memory_space<vmem>>, vector<8x8x1xf32>
    tpu.vector_store %arg7[%c0_28, %c0_29, %c0_30], %12 {strides = array<i32>} : memref<8x8x1xf32, #tpu.memory_space<vmem>>, vector<8x8x1xf32>,
    %c0_i32_31 = arith.constant 0 : i32
    %32 = arith.cmpi eq, %arg2, %c0_i32_31 : i32
    %33 = arith.extui %32 : i1 to i32
    %c0_i32_32 = arith.constant 0 : i32
    %34 = arith.cmpi ne, %33, %c0_i32_32 : i32
    scf.if %34 {
      %c0_33 = arith.constant 0 : index
      %c0_34 = arith.constant 0 : index
      %c0_35 = arith.constant 0 : index
      %35 = vector.load %arg8[%c0_33, %c0_34, %c0_35] : memref<8x8x1xf32, #tpu.memory_space<vmem>>, vector<8x8x1xf32>
      %36 = tpu.reciprocal %35 {approx = true} : vector<8x8x1xf32> -> vector<8x8x1xf32>
      %c0_36 = arith.constant 0 : index
      %c0_37 = arith.constant 0 : index
      %c0_38 = arith.constant 0 : index
      %37 = vector.load %arg9[%c0_36, %c0_37, %c0_38] : memref<8x8x8xf32, #tpu.memory_space<vmem>>, vector<8x8x8xf32>
      %38 = vector.broadcast %36 : vector<8x8x1xf32> to vector<8x8x8xf32>
      %39 = arith.mulf %37, %38 : vector<8x8x8xf32>
      %40 = arith.truncf %39 : vector<8x8x8xf32> to vector<8x8x8xbf16>
      %c0_39 = arith.constant 0 : index
      %c0_40 = arith.constant 0 : index
      %c0_41 = arith.constant 0 : index
      %41 = vector.load %arg6[%c0_39, %c0_40, %c0_41] : memref<8x8x8xbf16, #tpu.memory_space<vmem>>, vector<8x8x8xbf16>
      tpu.vector_store %arg6[%c0_39, %c0_40, %c0_41], %40 {strides = array<i32>} : memref<8x8x8xbf16, #tpu.memory_space<vmem>>, vector<8x8x8xbf16>,
    } else {
    }
    return
  }
  func.func @transform_0(%arg0: i32, %arg1: i32, %arg2: i32) -> (i32, i32, i32) {
    %c0_i32 = arith.constant 0 : i32
    %c0_i32_0 = arith.constant 0 : i32
    return %arg0, %arg1, %c0_i32 : i32, i32, i32
  }
  func.func @transform_1(%arg0: i32, %arg1: i32, %arg2: i32) -> (i32, i32, i32) {
    %c0_i32 = arith.constant 0 : i32
    %c0_i32_0 = arith.constant 0 : i32
    return %arg0, %arg2, %c0_i32 : i32, i32, i32
  }
  func.func @transform_2(%arg0: i32, %arg1: i32, %arg2: i32) -> (i32, i32, i32) {
    %c0_i32 = arith.constant 0 : i32
    %c0_i32_0 = arith.constant 0 : i32
    return %arg0, %arg2, %c0_i32 : i32, i32, i32
  }
  func.func @transform_3(%arg0: i32, %arg1: i32, %arg2: i32) -> (i32, i32, i32) {
    %c0_i32 = arith.constant 0 : i32
    %c0_i32_0 = arith.constant 0 : i32
    return %arg0, %arg1, %c0_i32 : i32, i32, i32
  }
}

module attributes {stable_mosaic.version = 11 : i64} {
  func.func @_linear_kernel(%arg0: i32, %arg1: i32, %arg2: i32, %arg3: memref<1x16x32xbf16, #tpu.memory_space<vmem>>, %arg4: memref<1x32x32xf32, #tpu.memory_space<vmem>>, %arg5: memref<1x1x32xf32, #tpu.memory_space<vmem>>, %arg6: memref<1x16x32xf32, #tpu.memory_space<vmem>>) attributes {dimension_semantics = [#tpu.dimension_semantics<parallel>, #tpu.dimension_semantics<parallel>, #tpu.dimension_semantics<parallel>], iteration_bounds = array<i64: 1, 1, 1>, scalar_prefetch = 0 : i64, scratch_operands = 0 : i64, tpu.core_type = #tpu.core_type<tc>, window_params = [{transform_indices = @transform_0, window_bounds = array<i64: 1, 16, 32>}, {transform_indices = @transform_1, window_bounds = array<i64: 1, 32, 32>}, {transform_indices = @transform_2, window_bounds = array<i64: 1, 1, 32>}, {transform_indices = @transform_3, window_bounds = array<i64: 1, 16, 32>}]} {
    %c0 = arith.constant 0 : index
    %c0_0 = arith.constant 0 : index
    %c0_1 = arith.constant 0 : index
    %0 = vector.load %arg3[%c0, %c0_0, %c0_1] : memref<1x16x32xbf16, #tpu.memory_space<vmem>>, vector<1x16x32xbf16>
    %1 = vector.shape_cast %0 : vector<1x16x32xbf16> to vector<16x32xbf16>
    %c0_2 = arith.constant 0 : index
    %c0_3 = arith.constant 0 : index
    %c0_4 = arith.constant 0 : index
    %2 = vector.load %arg4[%c0_2, %c0_3, %c0_4] : memref<1x32x32xf32, #tpu.memory_space<vmem>>, vector<1x32x32xf32>
    %3 = vector.shape_cast %2 : vector<1x32x32xf32> to vector<32x32xf32>
    %4 = arith.truncf %3 : vector<32x32xf32> to vector<32x32xbf16>
    %cst = arith.constant dense<0.000000e+00> : vector<16x32xf32>
    %5 = tpu.matmul %1, %4, %cst {dimension_numbers = #tpu.dot_dimension_numbers<[1], [0], [0], [1], [0, 0, 1, 1], [], []>} : vector<16x32xbf16>, vector<32x32xbf16>, vector<16x32xf32> -> vector<16x32xf32>
    %c0_5 = arith.constant 0 : index
    %c0_6 = arith.constant 0 : index
    %c0_7 = arith.constant 0 : index
    %6 = vector.load %arg5[%c0_5, %c0_6, %c0_7] : memref<1x1x32xf32, #tpu.memory_space<vmem>>, vector<1x1x32xf32>
    %7 = vector.shape_cast %6 : vector<1x1x32xf32> to vector<1x32xf32>
    %8 = vector.broadcast %7 : vector<1x32xf32> to vector<16x32xf32>
    %9 = arith.addf %5, %8 : vector<16x32xf32>
    %c0_8 = arith.constant 0 : index
    %c0_9 = arith.constant 0 : index
    %c0_10 = arith.constant 0 : index
    %10 = vector.load %arg6[%c0_8, %c0_9, %c0_10] : memref<1x16x32xf32, #tpu.memory_space<vmem>>, vector<1x16x32xf32>
    %11 = vector.shape_cast %10 : vector<1x16x32xf32> to vector<16x32xf32>
    %12 = vector.shape_cast %9 : vector<16x32xf32> to vector<1x16x32xf32>
    tpu.vector_store %arg6[%c0_8, %c0_9, %c0_10], %12 {strides = array<i32>} : memref<1x16x32xf32, #tpu.memory_space<vmem>>, vector<1x16x32xf32>,
    return
  }
  func.func @transform_0(%arg0: i32, %arg1: i32, %arg2: i32) -> (i32, i32, i32) {
    %c0_i32 = arith.constant 0 : i32
    %c0_i32_0 = arith.constant 0 : i32
    return %arg0, %arg1, %c0_i32 : i32, i32, i32
  }
  func.func @transform_1(%arg0: i32, %arg1: i32, %arg2: i32) -> (i32, i32, i32) {
    %c0_i32 = arith.constant 0 : i32
    %c0_i32_0 = arith.constant 0 : i32
    return %arg0, %c0_i32, %arg2 : i32, i32, i32
  }
  func.func @transform_2(%arg0: i32, %arg1: i32, %arg2: i32) -> (i32, i32, i32) {
    %c0_i32 = arith.constant 0 : i32
    %c0_i32_0 = arith.constant 0 : i32
    return %arg0, %c0_i32, %arg2 : i32, i32, i32
  }
  func.func @transform_3(%arg0: i32, %arg1: i32, %arg2: i32) -> (i32, i32, i32) {
    %c0_i32 = arith.constant 0 : i32
    return %arg0, %arg1, %arg2 : i32, i32, i32
  }
}

</mosaic_0001>

<llo_original>
// kernel: multi_head_attention.3
$region0: #{multi_head_attention.3}
  #allocation0 [shape = 'u32[]', space=smem, size = 0x4, offset = 0x4, fixed_abs, tag = 'smem constant byte address 0x4 - core index']
  #allocation1 [shape = 'u32[72,128]{1,0:T(1,128)}', space=vmem, size = 0x9000, scoped, tag = 'internal scratch']
  %s0 = inlined_call_operand.vmem [shape: f32[3,16,32], index: 0, kind: input, shape index: {}]
  %s1 = inlined_call_operand.vmem [shape: f32[3,32,32], index: 1, kind: input, shape index: {}]
  %s2 = inlined_call_operand.vmem [shape: f32[3,1,32], index: 2, kind: input, shape index: {}]
  %s3 = inlined_call_operand.vmem [shape: bf16[3,16,32], index: 3, kind: output, shape index: {}]
  %s4 = sld [smem:[#allocation0]]
  $region45: #{multi_head_attention.3} parent=0
    _
  %s6 = ssub.s32 1, %s4
  %s7 = scalar_select 0, %s6, %s4
  loop: start=0, step=1, limit=5
  $region2: #{multi_head_attention.3} parent=0 // loop_pre_header
    _
  $region3: #{multi_head_attention.3} parent=0 // loop_header
    %s9 = sphi 0, %s13
    %p10 = scmp.ge.s32.totalorder %s9, 5
    %s16 = sphi 0, %s35
    %s17 = sphi 0, %s31
    %s18 = sphi 0, %s27
    %s19 = sphi 0, %s16
    %s20 = sphi 0, %s17
    %s21 = sphi 0, %s18
    %s22 = sphi 0, %s19
    %s23 = sphi 0, %s20
    %s24 = sphi 0, %s21
    %s40 = sphi 0, %s42
    %s43 = sphi 0, %s40
    %s44 = sphi 0, %s43
    %s60 = sphi 0, %s44
    %s68 = sphi 0, %s70
    %s71 = sphi 0, %s68
    %s72 = sphi 0, %s71
    %s88 = sphi 0, %s72
    %s96 = sphi 0, %s98
    %s99 = sphi 0, %s96
    %s100 = sphi 0, %s99
    %s116 = sphi 0, %s100
    %s126 = sphi 0, %s128
    %s129 = sphi 0, %s126
    %s130 = sphi 0, %s129
    %s146 = sphi 0, %s130
  $region4: #{multi_head_attention.3} parent=0 // loop_header_branch
    %12 = sbr.rel (%p10) target = $region8
  $region5: #{multi_head_attention.3} parent=0 // loop_body
    %s14 = ssub.s32 %s9, 1
    %s15 = ssub.s32 %s9, 2
    %s25 = sadd.s32 1, %s18
    %p26 = scmp.ge.s32.totalorder %s25, 1
    %s27 = scalar_select %p26, 0, %s25
    %s28 = sadd.s32 1, %s17
    %s29 = scalar_select %p26, %s28, %s17
    %p30 = scmp.ge.s32.totalorder %s29, 1
    %s31 = scalar_select %p30, 0, %s29
    %s32 = sadd.s32 1, %s16
    %s33 = scalar_select %p30, %s32, %s16
    %p34 = scmp.ge.s32.totalorder %s33, 3
    %s35 = scalar_select %p34, 0, %s33
    %s36 = ssub.s32 %s16, %s35
    %s37 = ssub.s32 %s17, %s31
    %s38 = sor.u32 %s36, %s37
    %p39 = scmp.eq.s32.totalorder %s38, 0
    %s41 = sadd.s32 %s40, 1
    %s42 = scalar_select %p39, %s40, %s41
    %p45 = pneg %p39
    %p46 = scmp.eq.s32.totalorder %s9, 2
    %p47 = por %p45, %p46
    %p48 = scmp.ne.s32.totalorder %s40, %s43
    %p49 = scmp.eq.s32.totalorder %s9, 0
    %p50 = por %p48, %p49
    %p51 = scmp.ne.s32.totalorder %s40, %s43
    %p52 = scmp.eq.s32.totalorder %s14, 2
    %p53 = por %p51, %p52
    %p54 = scmp.ne.s32.totalorder %s43, %s44
    %p55 = scmp.eq.s32.totalorder %s14, 0
    %p56 = por %p54, %p55
    %p57 = scmp.ne.s32.totalorder %s43, %s44
    %p58 = scmp.eq.s32.totalorder %s15, 2
    %p59 = por %p57, %p58
    %p61 = scmp.ne.s32.totalorder %s44, %s60
    %p62 = scmp.eq.s32.totalorder %s15, 0
    %p63 = por %p61, %p62
    %s64 = ssub.s32 %s16, %s35
    %s65 = ssub.s32 %s18, %s27
    %s66 = sor.u32 %s64, %s65
    %p67 = scmp.eq.s32.totalorder %s66, 0
    %s69 = sadd.s32 %s68, 1
    %s70 = scalar_select %p67, %s68, %s69
    %p73 = pneg %p67
    %p74 = scmp.eq.s32.totalorder %s9, 2
    %p75 = por %p73, %p74
    %p76 = scmp.ne.s32.totalorder %s68, %s71
    %p77 = scmp.eq.s32.totalorder %s9, 0
    %p78 = por %p76, %p77
    %p79 = scmp.ne.s32.totalorder %s68, %s71
    %p80 = scmp.eq.s32.totalorder %s14, 2
    %p81 = por %p79, %p80
    %p82 = scmp.ne.s32.totalorder %s71, %s72
    %p83 = scmp.eq.s32.totalorder %s14, 0
    %p84 = por %p82, %p83
    %p85 = scmp.ne.s32.totalorder %s71, %s72
    %p86 = scmp.eq.s32.totalorder %s15, 2
    %p87 = por %p85, %p86
    %p89 = scmp.ne.s32.totalorder %s72, %s88
    %p90 = scmp.eq.s32.totalorder %s15, 0
    %p91 = por %p89, %p90
    %s92 = ssub.s32 %s16, %s35
    %s93 = ssub.s32 %s18, %s27
    %s94 = sor.u32 %s92, %s93
    %p95 = scmp.eq.s32.totalorder %s94, 0
    %s97 = sadd.s32 %s96, 1
    %s98 = scalar_select %p95, %s96, %s97
    %p101 = pneg %p95
    %p102 = scmp.eq.s32.totalorder %s9, 2
    %p103 = por %p101, %p102
    %p104 = scmp.ne.s32.totalorder %s96, %s99
    %p105 = scmp.eq.s32.totalorder %s9, 0
    %p106 = por %p104, %p105
    %p107 = scmp.ne.s32.totalorder %s96, %s99
    %p108 = scmp.eq.s32.totalorder %s14, 2
    %p109 = por %p107, %p108
    %p110 = scmp.ne.s32.totalorder %s99, %s100
    %p111 = scmp.eq.s32.totalorder %s14, 0
    %p112 = por %p110, %p111
    %p113 = scmp.ne.s32.totalorder %s99, %s100
    %p114 = scmp.eq.s32.totalorder %s15, 2
    %p115 = por %p113, %p114
    %p117 = scmp.ne.s32.totalorder %s100, %s116
    %p118 = scmp.eq.s32.totalorder %s15, 0
    %p119 = por %p117, %p118
    %s120 = ssub.s32 %s16, %s35
    %s121 = ssub.s32 %s17, %s31
    %s122 = sor.u32 %s120, %s121
    %s123 = ssub.s32 %s18, %s27
    %s124 = sor.u32 %s122, %s123
    %p125 = scmp.eq.s32.totalorder %s124, 0
    %s127 = sadd.s32 %s126, 1
    %s128 = scalar_select %p125, %s126, %s127
    %p131 = pneg %p125
    %p132 = scmp.eq.s32.totalorder %s9, 2
    %p133 = por %p131, %p132
    %p134 = scmp.ne.s32.totalorder %s126, %s129
    %p135 = scmp.eq.s32.totalorder %s9, 0
    %p136 = por %p134, %p135
    %p137 = scmp.ne.s32.totalorder %s126, %s129
    %p138 = scmp.eq.s32.totalorder %s14, 2
    %p139 = por %p137, %p138
    %p140 = scmp.ne.s32.totalorder %s129, %s130
    %p141 = scmp.eq.s32.totalorder %s14, 0
    %p142 = por %p140, %p141
    %p143 = scmp.ne.s32.totalorder %s129, %s130
    %p144 = scmp.eq.s32.totalorder %s15, 2
    %p145 = por %p143, %p144
    %p147 = scmp.ne.s32.totalorder %s130, %s146
    %p148 = scmp.eq.s32.totalorder %s15, 0
    %p149 = por %p147, %p148
    %p150 = scmp.le.s32.totalorder 1, %s9
    %p151 = scmp.lt.s32.totalorder %s9, 4
    %p152 = pnand %p150, %p151
    %p153 = pneg %p152
    // Predicated region
    $region9: #{multi_head_attention.3} parent=5 // pred_check
      _
    $region10: #{multi_head_attention.3} parent=5 // pred_check_branch
      %155 = sbr.rel (%p152) target = $region12
    $region11: #{multi_head_attention.3} parent=5 // pred_region
      %s156 = ssub.s32 %s9, 1
    $region12: #{multi_head_attention.3} parent=5 // pred_fallthru
      _
    %p157 = scmp.lt.s32.totalorder %s9, 3
    // Predicated region
    $region13: #{multi_head_attention.3} parent=5 // pred_check
      %p158 = pneg %p157
    $region14: #{multi_head_attention.3} parent=5 // pred_check_branch
      %160 = sbr.rel (%p158) target = $region16
    $region15: #{multi_head_attention.3} parent=5 // pred_region
      // Predicated region
      $region17: #{multi_head_attention.3} parent=15 // pred_check
        %p161 = pneg %p50
      $region18: #{multi_head_attention.3} parent=15 // pred_check_branch
        %163 = sbr.rel (%p161) target = $region20
      $region19: #{multi_head_attention.3} parent=15 // pred_region
        %s164 = smul.u32 2, %s17
        %p165 = scmp.lt.s32.totalorder %s16, 2
        %s166 = scalar_select %p165, %s16, 2
        %p167 = scmp.lt.s32.totalorder %s164, 1
        %s168 = scalar_select %p167, %s164, 1
        %s169 = smul.addr %s166, 2
        %s170 = sadd.s32 %s168, %s169
        %s171 = smul.addr %s170, 8
        %s172 = scalar_lea.vmem %s0, %s171
        %s173 = smul.u32 2, %s17
      $region20: #{multi_head_attention.3} parent=15 // pred_fallthru
        _
      // Predicated region
      $region21: #{multi_head_attention.3} parent=15 // pred_check
        %p174 = pneg %p78
      $region22: #{multi_head_attention.3} parent=15 // pred_check_branch
        %176 = sbr.rel (%p174) target = $region24
      $region23: #{multi_head_attention.3} parent=15 // pred_region
        %p177 = scmp.lt.s32.totalorder %s16, 2
        %s178 = scalar_select %p177, %s16, 2
        %p179 = scmp.lt.s32.totalorder %s18, 0
        %s180 = scalar_select %p179, %s18, 0
        %s181 = smul.addr %s178, 4
        %s182 = sadd.s32 %s180, %s181
        %s183 = smul.addr %s182, 8
        %s184 = scalar_lea.vmem %s1, %s183
      $region24: #{multi_head_attention.3} parent=15 // pred_fallthru
        _
      // Predicated region
      $region25: #{multi_head_attention.3} parent=15 // pred_check
        %p185 = pneg %p106
      $region26: #{multi_head_attention.3} parent=15 // pred_check_branch
        %187 = sbr.rel (%p185) target = $region28
      $region27: #{multi_head_attention.3} parent=15 // pred_region
        %p188 = scmp.lt.s32.totalorder %s16, 2
        %s189 = scalar_select %p188, %s16, 2
        %p190 = scmp.lt.s32.totalorder %s18, 0
        %s191 = scalar_select %p190, %s18, 0
        %s192 = sadd.s32 %s191, %s189
        %s193 = scalar_lea.vmem %s2, %s192
      $region28: #{multi_head_attention.3} parent=15 // pred_fallthru
        _
    $region16: #{multi_head_attention.3} parent=5 // pred_fallthru
      _
    %p194 = scmp.le.s32.totalorder 1, %s9
    %p195 = scmp.lt.s32.totalorder %s9, 4
    %p196 = pnand %p194, %p195
    %p197 = pneg %p196
    // Predicated region
    $region29: #{multi_head_attention.3} parent=5 // pred_check
      _
    $region30: #{multi_head_attention.3} parent=5 // pred_check_branch
      %199 = sbr.rel (%p196) target = $region32
    $region31: #{multi_head_attention.3} parent=5 // pred_region
      %s200 = ssub.s32 %s9, 1
      %s201 = smul.u32 2, %s20
      %p202 = scmp.lt.s32.totalorder %s19, 2
      %s203 = scalar_select %p202, %s19, 2
      %p204 = scmp.lt.s32.totalorder %s201, 1
      %s205 = scalar_select %p204, %s201, 1
      %s206 = smul.addr %s203, 2
      %s207 = sadd.s32 %s205, %s206
      %s208 = smul.addr %s207, 8
      %s209 = scalar_lea.vmem %s0, %s208
      %p210 = pneg %p56
      %p211 = pneg %p53
      %p212 = scmp.lt.s32.totalorder %s19, 2
      %s213 = scalar_select %p212, %s19, 2
      %p214 = scmp.lt.s32.totalorder %s21, 0
      %s215 = scalar_select %p214, %s21, 0
      %s216 = smul.addr %s213, 4
      %s217 = sadd.s32 %s215, %s216
      %s218 = smul.addr %s217, 8
      %s219 = scalar_lea.vmem %s1, %s218
      %p220 = pneg %p84
      %p221 = pneg %p81
      %p222 = scmp.lt.s32.totalorder %s19, 2
      %s223 = scalar_select %p222, %s19, 2
      %p224 = scmp.lt.s32.totalorder %s21, 0
      %s225 = scalar_select %p224, %s21, 0
      %s226 = sadd.s32 %s225, %s223
      %s227 = scalar_lea.vmem %s2, %s226
      %p228 = pneg %p112
      %p229 = pneg %p109
      %p230 = pneg %p142
      %p231 = pneg %p139
      %s232 = smul.u32 2, %s20
      %p233 = scmp.lt.s32.totalorder %s19, 2
      %s234 = scalar_select %p233, %s19, 2
      %p235 = scmp.lt.s32.totalorder %s232, 1
      %s236 = scalar_select %p235, %s232, 1
      %p237 = scmp.lt.s32.totalorder %s21, 0
      %s238 = scalar_select %p237, %s21, 0
      %s239 = sadd.s32 %s238, %s236
      %s240 = smul.addr %s234, 2
      %s241 = sadd.s32 %s239, %s240
      %s242 = smul.addr %s241, 4
      %s243 = scalar_lea.vmem %s3, %s242
      %s244 = smul.u32 2, %s20
      %p245 = scmp.lt.s32.totalorder %s19, 2
      %s246 = scalar_select %p245, %s19, 2
      %p247 = scmp.lt.s32.totalorder %s244, 1
      %s248 = scalar_select %p247, %s244, 1
      %s249 = smul.addr %s246, 2
      %s250 = sadd.s32 %s248, %s249
      %s251 = smul.addr %s250, 8
      %s252 = scalar_lea.vmem %s0, %s251
      %s253 = smul.u32 2, %s20
      %p254 = scmp.lt.s32.totalorder %s19, 2
      %s255 = scalar_select %p254, %s19, 2
      %p256 = scmp.lt.s32.totalorder %s21, 0
      %s257 = scalar_select %p256, %s21, 0
      %s258 = smul.addr %s255, 4
      %s259 = sadd.s32 %s257, %s258
      %s260 = smul.addr %s259, 8
      %s261 = scalar_lea.vmem %s1, %s260
      %p262 = scmp.lt.s32.totalorder %s19, 2
      %s263 = scalar_select %p262, %s19, 2
      %p264 = scmp.lt.s32.totalorder %s21, 0
      %s265 = scalar_select %p264, %s21, 0
      %s266 = sadd.s32 %s265, %s263
      %s267 = scalar_lea.vmem %s2, %s266
      %s268 = smul.u32 2, %s20
      %p269 = scmp.lt.s32.totalorder %s19, 2
      %s270 = scalar_select %p269, %s19, 2
      %p271 = scmp.lt.s32.totalorder %s268, 1
      %s272 = scalar_select %p271, %s268, 1
      %p273 = scmp.lt.s32.totalorder %s21, 0
      %s274 = scalar_select %p273, %s21, 0
      %s275 = sadd.s32 %s274, %s272
      %s276 = smul.addr %s270, 2
      %s277 = sadd.s32 %s275, %s276
      %s278 = smul.addr %s277, 4
      %s279 = scalar_lea.vmem %s3, %s278
      %s280 = smul.u32 2, %s20
      %v282 = vld [vmem:[%s252] sm:$0xff]
      %v283 = vld [vmem:[%s252 + $0x8] sm:$0xff]
      %v284 = vpack.c.bf16 %v283, %v282
      %v285 = vld [vmem:[%s261] sm:$0xff]
      %v286 = vld [vmem:[%s261 + $0x8] sm:$0xff]
      %v287 = vld [vmem:[%s261 + $0x10] sm:$0xff]
      %v288 = vld [vmem:[%s261 + $0x18] sm:$0xff]
      %v289 = vpack.c.bf16 %v286, %v285
      %v290 = vpack.c.bf16 %v288, %v287
      %v291 = vld [vmem:[%s267] sm:$0x1]
      %v293 = vperm.slane %v291, 0
      %vm295 = vcmask 261120
      %v297 = vsel %vm295, %v284, 0
      %299 = vmatpush.bf16.msra.mxu0 0
      %300 = vmatpush.bf16.msra.mxu0 0
      %301 = vmatpush.bf16.msra.mxu0 0
      %302 = vmatpush.bf16.msra.mxu0 0
      %303 = vmatpush.bf16.msra.mxu0 0
      %304 = vmatpush.bf16.msra.mxu0 0
      %305 = vmatpush.bf16.msra.mxu0 %v290
      %306 = vmatpush.bf16.msra.mxu0 %v289
      %307 = vmatmul.bf16.gmra.mxu0 %v297
      %v308 = vpop.f32.mrf.mxu0
      %v309 = vadd.f32 %v293, %v308
      %v310 = vpop.f32.mrf.mxu0
      %v311 = vadd.f32 %v293, %v310
      %312 = vdwg.mxu0
      %v313 = vpack.c.bf16 %v309, %v309
      %v314 = vpack.c.bf16 %v311, %v311
      %vm315 = vcmask 257024
      %316 = vst.msk [vmem:[%s279] sm:$0xf] %vm315, %v313
      %317 = vst.msk [vmem:[%s279 + $0x4] sm:$0xf] %vm315, %v314
      %s318 = smul.u32 2, %s20
      %p319 = scmp.lt.s32.totalorder %s19, 2
      %s320 = scalar_select %p319, %s19, 2
      %p321 = scmp.lt.s32.totalorder %s318, 1
      %s322 = scalar_select %p321, %s318, 1
      %p323 = scmp.lt.s32.totalorder %s21, 0
      %s324 = scalar_select %p323, %s21, 0
      %s325 = sadd.s32 %s324, %s322
      %s326 = smul.addr %s320, 2
      %s327 = sadd.s32 %s325, %s326
      %s328 = smul.addr %s327, 4
      %s329 = scalar_lea.vmem %s3, %s328
      // Predicated region
      $region33: #{multi_head_attention.3} parent=31 // pred_check
        %p330 = pneg %p139
      $region34: #{multi_head_attention.3} parent=31 // pred_check_branch
        %332 = sbr.rel (%p330) target = $region36
      $region35: #{multi_head_attention.3} parent=31 // pred_region
        %s333 = smul.u32 2, %s20
      $region36: #{multi_head_attention.3} parent=31 // pred_fallthru
        _
    $region32: #{multi_head_attention.3} parent=5 // pred_fallthru
      _
    %p334 = scmp.le.s32.totalorder 2, %s9
    // Predicated region
    $region37: #{multi_head_attention.3} parent=5 // pred_check
      %p335 = pneg %p334
    $region38: #{multi_head_attention.3} parent=5 // pred_check_branch
      %337 = sbr.rel (%p335) target = $region40
    $region39: #{multi_head_attention.3} parent=5 // pred_region
      %s338 = ssub.s32 %s9, 2
      // Predicated region
      $region41: #{multi_head_attention.3} parent=39 // pred_check
        %p339 = pneg %p145
      $region42: #{multi_head_attention.3} parent=39 // pred_check_branch
        %341 = sbr.rel (%p339) target = $region44
      $region43: #{multi_head_attention.3} parent=39 // pred_region
        %s342 = smul.u32 2, %s23
        %p343 = scmp.lt.s32.totalorder %s22, 2
        %s344 = scalar_select %p343, %s22, 2
        %p345 = scmp.lt.s32.totalorder %s342, 1
        %s346 = scalar_select %p345, %s342, 1
        %p347 = scmp.lt.s32.totalorder %s24, 0
        %s348 = scalar_select %p347, %s24, 0
        %s349 = sadd.s32 %s348, %s346
        %s350 = smul.addr %s344, 2
        %s351 = sadd.s32 %s349, %s350
        %s352 = smul.addr %s351, 4
        %s353 = scalar_lea.vmem %s3, %s352
      $region44: #{multi_head_attention.3} parent=39 // pred_fallthru
        _
    $region40: #{multi_head_attention.3} parent=5 // pred_fallthru
      _
  $region6: #{multi_head_attention.3} parent=0 // loop_footer
    %s13 = sadd.s32 1, %s9
  $region7: #{multi_head_attention.3} parent=0 // loop_footer_branch
    %8 = sbr.rel target = $region3
  $region8: #{multi_head_attention.3} parent=0 // loop_exit
    _

// kernel: multi_head_attention.5
$region0: #{multi_head_attention.5}
  #allocation0 [shape = 'u32[]', space=smem, size = 0x4, offset = 0x4, fixed_abs, tag = 'smem constant byte address 0x4 - core index']
  #allocation1 [shape = 'u32[72,128]{1,0:T(1,128)}', space=vmem, size = 0x9000, scoped, tag = 'internal scratch']
  %s0 = inlined_call_operand.vmem [shape: bf16[1,16,32], index: 0, kind: input, shape index: {}]
  %s1 = inlined_call_operand.vmem [shape: f32[1,32,32], index: 1, kind: input, shape index: {}]
  %s2 = inlined_call_operand.vmem [shape: f32[1,1,32], index: 2, kind: input, shape index: {}]
  %s3 = inlined_call_operand.hbm [shape: f32[1,16,32], index: 3, kind: output, shape index: {}]
  %s4 = sld [smem:[#allocation0]]
  $region22: #{multi_head_attention.5} parent=0
    _
  %s6 = ssub.s32 1, %s4
  %s7 = scalar_select 0, %s6, %s4
  $region1: #{multi_head_attention.5} parent=0
    #allocation2 [shape = 'u8[8192]{0}', space=vmem, size = 0x2000, scoped, tag = 'output window, operand 0, single buffered']
    #allocation3 [shape = 's32[1]{0}', space=sflag, size = 0x4, scoped, tag = 'scoped memory for multi_head_attention.5']
    %8 = vsyncpa [#allocation3], 0
    // Predicated region
    $region2: #{multi_head_attention.5} parent=1 // pred_check
      _
    $region3: #{multi_head_attention.5} parent=1 // pred_check_branch
      %10 = sbr.rel (0) target = $region5
    $region4: #{multi_head_attention.5} parent=1 // pred_region
      _
    $region5: #{multi_head_attention.5} parent=1 // pred_fallthru
      _
    // Predicated region
    $region6: #{multi_head_attention.5} parent=1 // pred_check
      _
    $region7: #{multi_head_attention.5} parent=1 // pred_check_branch
      %12 = sbr.rel (0) target = $region9
    $region8: #{multi_head_attention.5} parent=1 // pred_region
      _
    $region9: #{multi_head_attention.5} parent=1 // pred_fallthru
      _
    // Predicated region
    $region10: #{multi_head_attention.5} parent=1 // pred_check
      _
    $region11: #{multi_head_attention.5} parent=1 // pred_check_branch
      %14 = sbr.rel (0) target = $region13
    $region12: #{multi_head_attention.5} parent=1 // pred_region
      _
    $region13: #{multi_head_attention.5} parent=1 // pred_fallthru
      _
    %v16 = vld [vmem:[%s0] sm:$0xf]
    %v17 = vld [vmem:[%s0 + $0x4] sm:$0xf]
    %v18 = vld [vmem:[%s1] sm:$0xff]
    %v19 = vld [vmem:[%s1 + $0x8] sm:$0xff]
    %v20 = vld [vmem:[%s1 + $0x10] sm:$0xff]
    %v21 = vld [vmem:[%s1 + $0x18] sm:$0xff]
    %v22 = vpack.c.bf16 %v19, %v18
    %v23 = vpack.c.bf16 %v21, %v20
    %v24 = vld [vmem:[%s2] sm:$0x1]
    %v26 = vperm.slane %v24, 0
    %v30 = vunpack.c.l.b16 %v16
    %v31 = vunpack.c.l.b16 %v17
    %v32 = vpack.c.b16 %v31, %v30
    %vm33 = vcmask 261120
    %v35 = vsel %vm33, %v32, 0
    %37 = vmatpush.bf16.msra.mxu0 0
    %38 = vmatpush.bf16.msra.mxu0 0
    %39 = vmatpush.bf16.msra.mxu0 0
    %40 = vmatpush.bf16.msra.mxu0 0
    %41 = vmatpush.bf16.msra.mxu0 0
    %42 = vmatpush.bf16.msra.mxu0 0
    %43 = vmatpush.bf16.msra.mxu0 %v23
    %44 = vmatpush.bf16.msra.mxu0 %v22
    %45 = vmatmul.bf16.gmra.mxu0 %v35
    %v46 = vpop.f32.mrf.mxu0
    %v47 = vadd.f32 %v26, %v46
    %v48 = vpop.f32.mrf.mxu0
    %v49 = vadd.f32 %v26, %v48
    %50 = vdwg.mxu0
    %51 = vst.msk [vmem:[#allocation2] sm:$0xff] %vm33, %v47
    %52 = vst.msk [vmem:[#allocation2 + $0x8] sm:$0xff] %vm33, %v49
    // Predicated region
    $region14: #{multi_head_attention.5} parent=1 // pred_check
      _
    $region15: #{multi_head_attention.5} parent=1 // pred_check_branch
      %54 = sbr.rel (0) target = $region17
    $region16: #{multi_head_attention.5} parent=1 // pred_region
      %56 = vsyncadd [#allocation3], 0
      %s57 = sshll.u32 [#allocation2], 4
      %s58 = int_to_ptr.vmem [resolvable:$true] %s57
      %s59 = sshll.u32 %s3, 4
      %s60 = int_to_ptr.hbm [resolvable:$true] %s59
      %65 = dma.vmem_to_hbm [thread:$0]  %s58, 256, %s60, [#allocation3], 128, 128, 8
    $region17: #{multi_head_attention.5} parent=1 // pred_fallthru
      _
    // Predicated region
    $region18: #{multi_head_attention.5} parent=1 // pred_check
      _
    $region19: #{multi_head_attention.5} parent=1 // pred_check_branch
      %67 = sbr.rel (0) target = $region21
    $region20: #{multi_head_attention.5} parent=1 // pred_region
      %69 = dma.done [#allocation3], 256
    $region21: #{multi_head_attention.5} parent=1 // pred_fallthru
      _
    %70 = vsyncpa [#allocation3], 1

// kernel: multi_head_attention.4
$region0: #{multi_head_attention.4}
  #allocation0 [shape = 'u32[]', space=smem, size = 0x4, offset = 0x4, fixed_abs, tag = 'smem constant byte address 0x4 - core index']
  #allocation1 [shape = 'u32[72,128]{1,0:T(1,128)}', space=vmem, size = 0x9000, scoped, tag = 'internal scratch']
  #allocation2 [shape = 'f32[8,8,1]{2,1,0:T(8,128)}', space=vmem, size = 0x8000, scoped, tag = 'scratch operand']
  #allocation3 [shape = 'f32[8,8,1]{2,1,0:T(8,128)}', space=vmem, size = 0x8000, scoped, tag = 'scratch operand']
  #allocation4 [shape = 'f32[8,8,8]{2,1,0:T(8,128)}', space=vmem, size = 0x8000, scoped, tag = 'scratch operand']
  %s0 = inlined_call_operand.vmem [shape: bf16[8,8,8], index: 0, kind: input, shape index: {}]
  %s1 = inlined_call_operand.vmem [shape: bf16[8,8,8], index: 1, kind: input, shape index: {}]
  %s2 = inlined_call_operand.vmem [shape: bf16[8,8,8], index: 2, kind: input, shape index: {}]
  %s3 = inlined_call_operand.vmem [shape: bf16[8,8,8], index: 3, kind: output, shape index: {}]
  %s4 = sld [smem:[#allocation0]]
  $region30: #{multi_head_attention.4} parent=0
    _
  %s6 = ssub.s32 1, %s4
  %s7 = scalar_select 0, %s6, %s4
  // Predicated region
  $region2: #{multi_head_attention.4} parent=0 // pred_check
    _
  $region3: #{multi_head_attention.4} parent=0 // pred_check_branch
    %9 = sbr.rel (0) target = $region5
  $region4: #{multi_head_attention.4} parent=0 // pred_region
    _
  $region5: #{multi_head_attention.4} parent=0 // pred_fallthru
    _
  // Predicated region
  $region6: #{multi_head_attention.4} parent=0 // pred_check
    _
  $region7: #{multi_head_attention.4} parent=0 // pred_check_branch
    %11 = sbr.rel (0) target = $region9
  $region8: #{multi_head_attention.4} parent=0 // pred_region
    _
  $region9: #{multi_head_attention.4} parent=0 // pred_fallthru
    _
  // Predicated region
  $region10: #{multi_head_attention.4} parent=0 // pred_check
    _
  $region11: #{multi_head_attention.4} parent=0 // pred_check_branch
    %13 = sbr.rel (0) target = $region13
  $region12: #{multi_head_attention.4} parent=0 // pred_region
    _
  $region13: #{multi_head_attention.4} parent=0 // pred_fallthru
    _
  %p15 = scmp.eq.s32.totalorder 0, 0
  // Predicated region
  $region14: #{multi_head_attention.4} parent=0 // pred_check
    %p16 = pneg %p15
  $region15: #{multi_head_attention.4} parent=0 // pred_check_branch
    %18 = sbr.rel (%p16) target = $region17
  $region16: #{multi_head_attention.4} parent=0 // pred_region
    %vm19 = vcmask 7168
    %20 = vst.msk [vmem:[#allocation2] sm:$0xff] %vm19, -inf
    %21 = vst.msk [vmem:[#allocation2 + $0x8] sm:$0xff] %vm19, -inf
    %22 = vst.msk [vmem:[#allocation2 + $0x10] sm:$0xff] %vm19, -inf
    %23 = vst.msk [vmem:[#allocation2 + $0x18] sm:$0xff] %vm19, -inf
    %24 = vst.msk [vmem:[#allocation2 + $0x20] sm:$0xff] %vm19, -inf
    %25 = vst.msk [vmem:[#allocation2 + $0x28] sm:$0xff] %vm19, -inf
    %26 = vst.msk [vmem:[#allocation2 + $0x30] sm:$0xff] %vm19, -inf
    %27 = vst.msk [vmem:[#allocation2 + $0x38] sm:$0xff] %vm19, -inf
    %28 = vst.msk [vmem:[#allocation3] sm:$0xff] %vm19, 0.0
    %29 = vst.msk [vmem:[#allocation3 + $0x8] sm:$0xff] %vm19, 0.0
    %30 = vst.msk [vmem:[#allocation3 + $0x10] sm:$0xff] %vm19, 0.0
    %31 = vst.msk [vmem:[#allocation3 + $0x18] sm:$0xff] %vm19, 0.0
    %32 = vst.msk [vmem:[#allocation3 + $0x20] sm:$0xff] %vm19, 0.0
    %33 = vst.msk [vmem:[#allocation3 + $0x28] sm:$0xff] %vm19, 0.0
    %34 = vst.msk [vmem:[#allocation3 + $0x30] sm:$0xff] %vm19, 0.0
    %35 = vst.msk [vmem:[#allocation3 + $0x38] sm:$0xff] %vm19, 0.0
    %vm36 = vcmask 64512
    %37 = vst.msk [vmem:[#allocation4] sm:$0xff] %vm36, 0.0
    %38 = vst.msk [vmem:[#allocation4 + $0x8] sm:$0xff] %vm36, 0.0
    %39 = vst.msk [vmem:[#allocation4 + $0x10] sm:$0xff] %vm36, 0.0
    %40 = vst.msk [vmem:[#allocation4 + $0x18] sm:$0xff] %vm36, 0.0
    %41 = vst.msk [vmem:[#allocation4 + $0x20] sm:$0xff] %vm36, 0.0
    %42 = vst.msk [vmem:[#allocation4 + $0x28] sm:$0xff] %vm36, 0.0
    %43 = vst.msk [vmem:[#allocation4 + $0x30] sm:$0xff] %vm36, 0.0
    %44 = vst.msk [vmem:[#allocation4 + $0x38] sm:$0xff] %vm36, 0.0
  $region17: #{multi_head_attention.4} parent=0 // pred_fallthru
    _
  %v45 = vld [vmem:[%s0] sm:$0xf]
  %v46 = vld [vmem:[%s0 + $0x4] sm:$0xf]
  %v47 = vld [vmem:[%s0 + $0x8] sm:$0xf]
  %v48 = vld [vmem:[%s0 + $0xc] sm:$0xf]
  %v49 = vld [vmem:[%s0 + $0x10] sm:$0xf]
  %v50 = vld [vmem:[%s0 + $0x14] sm:$0xf]
  %v51 = vld [vmem:[%s0 + $0x18] sm:$0xf]
  %v52 = vld [vmem:[%s0 + $0x1c] sm:$0xf]
  %v53 = vunpack.c.l.bf16 %v45
  %v54 = vunpack.c.l.bf16 %v46
  %v55 = vunpack.c.l.bf16 %v47
  %v56 = vunpack.c.l.bf16 %v48
  %v57 = vunpack.c.l.bf16 %v49
  %v58 = vunpack.c.l.bf16 %v50
  %v59 = vunpack.c.l.bf16 %v51
  %v60 = vunpack.c.l.bf16 %v52
  %v61 = vmul.f32 %v53, 0.35351563
  %v62 = vmul.f32 %v54, 0.35351563
  %v63 = vmul.f32 %v55, 0.35351563
  %v64 = vmul.f32 %v56, 0.35351563
  %v65 = vmul.f32 %v57, 0.35351563
  %v66 = vmul.f32 %v58, 0.35351563
  %v67 = vmul.f32 %v59, 0.35351563
  %v68 = vmul.f32 %v60, 0.35351563
  %v69 = vpack.c.bf16 %v61, %v61
  %v70 = vpack.c.bf16 %v62, %v62
  %v71 = vpack.c.bf16 %v63, %v63
  %v72 = vpack.c.bf16 %v64, %v64
  %v73 = vpack.c.bf16 %v65, %v65
  %v74 = vpack.c.bf16 %v66, %v66
  %v75 = vpack.c.bf16 %v67, %v67
  %v76 = vpack.c.bf16 %v68, %v68
  %v77 = vld [vmem:[%s1] sm:$0xf]
  %v78 = vld [vmem:[%s1 + $0x4] sm:$0xf]
  %v79 = vld [vmem:[%s1 + $0x8] sm:$0xf]
  %v80 = vld [vmem:[%s1 + $0xc] sm:$0xf]
  %v81 = vld [vmem:[%s1 + $0x10] sm:$0xf]
  %v82 = vld [vmem:[%s1 + $0x14] sm:$0xf]
  %v83 = vld [vmem:[%s1 + $0x18] sm:$0xf]
  %v84 = vld [vmem:[%s1 + $0x1c] sm:$0xf]
  %v85 = vld [vmem:[%s2] sm:$0xf]
  %v86 = vld [vmem:[%s2 + $0x4] sm:$0xf]
  %v87 = vld [vmem:[%s2 + $0x8] sm:$0xf]
  %v88 = vld [vmem:[%s2 + $0xc] sm:$0xf]
  %v89 = vld [vmem:[%s2 + $0x10] sm:$0xf]
  %v90 = vld [vmem:[%s2 + $0x14] sm:$0xf]
  %v91 = vld [vmem:[%s2 + $0x18] sm:$0xf]
  %v92 = vld [vmem:[%s2 + $0x1c] sm:$0xf]
  %vm93 = vcmask 64512
  %v95 = vsel %vm93, %v69, 0
  %v98 = vsel %vm93, %v77, 0
  %100 = vmatpush.bf16.xpose.msra.mxu0 0
  %101 = vmatpush.bf16.xpose.msra.mxu0 0
  %102 = vmatpush.bf16.xpose.msra.mxu0 0
  %103 = vmatpush.bf16.xpose.msra.mxu0 0
  %104 = vmatpush.bf16.xpose.msra.mxu0 0
  %105 = vmatpush.bf16.xpose.msra.mxu0 0
  %106 = vmatpush.bf16.xpose.msra.mxu0 0
  %107 = vmatpush.bf16.xpose.msra.mxu0 %v98
  %108 = vmatmul.bf16.gmra.mxu0 %v95
  %v109 = vpop.f32.mrf.mxu0
  %v110 = vadd.f32 0.0, %v109
  %v111 = vpop.f32.mrf.mxu0
  %112 = vdwg.mxu0
  %v114 = vsel %vm93, %v70, 0
  %v117 = vsel %vm93, %v78, 0
  %119 = vmatpush.bf16.xpose.msra.mxu0 0
  %120 = vmatpush.bf16.xpose.msra.mxu0 0
  %121 = vmatpush.bf16.xpose.msra.mxu0 0
  %122 = vmatpush.bf16.xpose.msra.mxu0 0
  %123 = vmatpush.bf16.xpose.msra.mxu0 0
  %124 = vmatpush.bf16.xpose.msra.mxu0 0
  %125 = vmatpush.bf16.xpose.msra.mxu0 0
  %126 = vmatpush.bf16.xpose.msra.mxu0 %v117
  %127 = vmatmul.bf16.gmra.mxu0 %v114
  %v128 = vpop.f32.mrf.mxu0
  %v129 = vadd.f32 0.0, %v128
  %v130 = vpop.f32.mrf.mxu0
  %131 = vdwg.mxu0
  %v133 = vsel %vm93, %v71, 0
  %v136 = vsel %vm93, %v79, 0
  %138 = vmatpush.bf16.xpose.msra.mxu0 0
  %139 = vmatpush.bf16.xpose.msra.mxu0 0
  %140 = vmatpush.bf16.xpose.msra.mxu0 0
  %141 = vmatpush.bf16.xpose.msra.mxu0 0
  %142 = vmatpush.bf16.xpose.msra.mxu0 0
  %143 = vmatpush.bf16.xpose.msra.mxu0 0
  %144 = vmatpush.bf16.xpose.msra.mxu0 0
  %145 = vmatpush.bf16.xpose.msra.mxu0 %v136
  %146 = vmatmul.bf16.gmra.mxu0 %v133
  %v147 = vpop.f32.mrf.mxu0
  %v148 = vadd.f32 0.0, %v147
  %v149 = vpop.f32.mrf.mxu0
  %150 = vdwg.mxu0
  %v152 = vsel %vm93, %v72, 0
  %v155 = vsel %vm93, %v80, 0
  %157 = vmatpush.bf16.xpose.msra.mxu0 0
  %158 = vmatpush.bf16.xpose.msra.mxu0 0
  %159 = vmatpush.bf16.xpose.msra.mxu0 0
  %160 = vmatpush.bf16.xpose.msra.mxu0 0
  %161 = vmatpush.bf16.xpose.msra.mxu0 0
  %162 = vmatpush.bf16.xpose.msra.mxu0 0
  %163 = vmatpush.bf16.xpose.msra.mxu0 0
  %164 = vmatpush.bf16.xpose.msra.mxu0 %v155
  %165 = vmatmul.bf16.gmra.mxu0 %v152
  %v166 = vpop.f32.mrf.mxu0
  %v167 = vadd.f32 0.0, %v166
  %v168 = vpop.f32.mrf.mxu0
  %169 = vdwg.mxu0
  %v171 = vsel %vm93, %v73, 0
  %v174 = vsel %vm93, %v81, 0
  %176 = vmatpush.bf16.xpose.msra.mxu0 0
  %177 = vmatpush.bf16.xpose.msra.mxu0 0
  %178 = vmatpush.bf16.xpose.msra.mxu0 0
  %179 = vmatpush.bf16.xpose.msra.mxu0 0
  %180 = vmatpush.bf16.xpose.msra.mxu0 0
  %181 = vmatpush.bf16.xpose.msra.mxu0 0
  %182 = vmatpush.bf16.xpose.msra.mxu0 0
  %183 = vmatpush.bf16.xpose.msra.mxu0 %v174
  %184 = vmatmul.bf16.gmra.mxu0 %v171
  %v185 = vpop.f32.mrf.mxu0
  %v186 = vadd.f32 0.0, %v185
  %v187 = vpop.f32.mrf.mxu0
  %188 = vdwg.mxu0
  %v190 = vsel %vm93, %v74, 0
  %v193 = vsel %vm93, %v82, 0
  %195 = vmatpush.bf16.xpose.msra.mxu0 0
  %196 = vmatpush.bf16.xpose.msra.mxu0 0
  %197 = vmatpush.bf16.xpose.msra.mxu0 0
  %198 = vmatpush.bf16.xpose.msra.mxu0 0
  %199 = vmatpush.bf16.xpose.msra.mxu0 0
  %200 = vmatpush.bf16.xpose.msra.mxu0 0
  %201 = vmatpush.bf16.xpose.msra.mxu0 0
  %202 = vmatpush.bf16.xpose.msra.mxu0 %v193
  %203 = vmatmul.bf16.gmra.mxu0 %v190
  %v204 = vpop.f32.mrf.mxu0
  %v205 = vadd.f32 0.0, %v204
  %v206 = vpop.f32.mrf.mxu0
  %207 = vdwg.mxu0
  %v209 = vsel %vm93, %v75, 0
  %v212 = vsel %vm93, %v83, 0
  %214 = vmatpush.bf16.xpose.msra.mxu0 0
  %215 = vmatpush.bf16.xpose.msra.mxu0 0
  %216 = vmatpush.bf16.xpose.msra.mxu0 0
  %217 = vmatpush.bf16.xpose.msra.mxu0 0
  %218 = vmatpush.bf16.xpose.msra.mxu0 0
  %219 = vmatpush.bf16.xpose.msra.mxu0 0
  %220 = vmatpush.bf16.xpose.msra.mxu0 0
  %221 = vmatpush.bf16.xpose.msra.mxu0 %v212
  %222 = vmatmul.bf16.gmra.mxu0 %v209
  %v223 = vpop.f32.mrf.mxu0
  %v224 = vadd.f32 0.0, %v223
  %v225 = vpop.f32.mrf.mxu0
  %226 = vdwg.mxu0
  %v228 = vsel %vm93, %v76, 0
  %v231 = vsel %vm93, %v84, 0
  %233 = vmatpush.bf16.xpose.msra.mxu0 0
  %234 = vmatpush.bf16.xpose.msra.mxu0 0
  %235 = vmatpush.bf16.xpose.msra.mxu0 0
  %236 = vmatpush.bf16.xpose.msra.mxu0 0
  %237 = vmatpush.bf16.xpose.msra.mxu0 0
  %238 = vmatpush.bf16.xpose.msra.mxu0 0
  %239 = vmatpush.bf16.xpose.msra.mxu0 0
  %240 = vmatpush.bf16.xpose.msra.mxu0 %v231
  %241 = vmatmul.bf16.gmra.mxu0 %v228
  %v242 = vpop.f32.mrf.mxu0
  %v243 = vadd.f32 0.0, %v242
  %v244 = vpop.f32.mrf.mxu0
  %245 = vdwg.mxu0
  %v246 = vld [vmem:[#allocation2] sm:$0xff]
  %v247 = vld [vmem:[#allocation2 + $0x8] sm:$0xff]
  %v248 = vld [vmem:[#allocation2 + $0x10] sm:$0xff]
  %v249 = vld [vmem:[#allocation2 + $0x18] sm:$0xff]
  %v250 = vld [vmem:[#allocation2 + $0x20] sm:$0xff]
  %v251 = vld [vmem:[#allocation2 + $0x28] sm:$0xff]
  %v252 = vld [vmem:[#allocation2 + $0x30] sm:$0xff]
  %v253 = vld [vmem:[#allocation2 + $0x38] sm:$0xff]
  %v254 = vsel %vm93, %v110, -inf
  %255 = vmax.xlane.f32.xlu0 %v254
  %v256 = vpop.xlane.xlu0 %255
  %v257 = vsel %vm93, %v129, -inf
  %258 = vmax.xlane.f32.xlu0 %v257
  %v259 = vpop.xlane.xlu0 %258
  %v260 = vsel %vm93, %v148, -inf
  %261 = vmax.xlane.f32.xlu0 %v260
  %v262 = vpop.xlane.xlu0 %261
  %v263 = vsel %vm93, %v167, -inf
  %264 = vmax.xlane.f32.xlu0 %v263
  %v265 = vpop.xlane.xlu0 %264
  %v266 = vsel %vm93, %v186, -inf
  %267 = vmax.xlane.f32.xlu0 %v266
  %v268 = vpop.xlane.xlu0 %267
  %v269 = vsel %vm93, %v205, -inf
  %270 = vmax.xlane.f32.xlu0 %v269
  %v271 = vpop.xlane.xlu0 %270
  %v272 = vsel %vm93, %v224, -inf
  %273 = vmax.xlane.f32.xlu0 %v272
  %v274 = vpop.xlane.xlu0 %273
  %v275 = vsel %vm93, %v243, -inf
  %276 = vmax.xlane.f32.xlu0 %v275
  %v277 = vpop.xlane.xlu0 %276
  %v278 = vmax.f32 %v246, %v256
  %v279 = vmax.f32 %v247, %v259
  %v280 = vmax.f32 %v248, %v262
  %v281 = vmax.f32 %v249, %v265
  %v282 = vmax.f32 %v250, %v268
  %v283 = vmax.f32 %v251, %v271
  %v284 = vmax.f32 %v252, %v274
  %v285 = vmax.f32 %v253, %v277
  %v286 = vsub.f32 %v246, %v278
  %v287 = vsub.f32 %v247, %v279
  %v288 = vsub.f32 %v248, %v280
  %v289 = vsub.f32 %v249, %v281
  %v290 = vsub.f32 %v250, %v282
  %v291 = vsub.f32 %v251, %v283
  %v292 = vsub.f32 %v252, %v284
  %v293 = vsub.f32 %v253, %v285
  %v294 = vmul.f32 %v286, 1.442695
  %v295 = vpow.pop %v294
  %v296 = vmul.f32 %v287, 1.442695
  %v297 = vpow.pop %v296
  %v298 = vmul.f32 %v288, 1.442695
  %v299 = vpow.pop %v298
  %v300 = vmul.f32 %v289, 1.442695
  %v301 = vpow.pop %v300
  %v302 = vmul.f32 %v290, 1.442695
  %v303 = vpow.pop %v302
  %v304 = vmul.f32 %v291, 1.442695
  %v305 = vpow.pop %v304
  %v306 = vmul.f32 %v292, 1.442695
  %v307 = vpow.pop %v306
  %v308 = vmul.f32 %v293, 1.442695
  %v309 = vpow.pop %v308
  %311 = vset.pattern.permute.xlu0 0
  %312 = vperm.xlu0 %311, %v278
  %v313 = vpop.permute.xlu0 %312
  %316 = vset.pattern.permute.xlu0 0
  %317 = vperm.xlu0 %316, %v279
  %v318 = vpop.permute.xlu0 %317
  %321 = vset.pattern.permute.xlu0 0
  %322 = vperm.xlu0 %321, %v280
  %v323 = vpop.permute.xlu0 %322
  %326 = vset.pattern.permute.xlu0 0
  %327 = vperm.xlu0 %326, %v281
  %v328 = vpop.permute.xlu0 %327
  %331 = vset.pattern.permute.xlu0 0
  %332 = vperm.xlu0 %331, %v282
  %v333 = vpop.permute.xlu0 %332
  %336 = vset.pattern.permute.xlu0 0
  %337 = vperm.xlu0 %336, %v283
  %v338 = vpop.permute.xlu0 %337
  %341 = vset.pattern.permute.xlu0 0
  %342 = vperm.xlu0 %341, %v284
  %v343 = vpop.permute.xlu0 %342
  %346 = vset.pattern.permute.xlu0 0
  %347 = vperm.xlu0 %346, %v285
  %v348 = vpop.permute.xlu0 %347
  %v350 = vsub.f32 %v110, %v313
  %v351 = vsub.f32 %v129, %v318
  %v352 = vsub.f32 %v148, %v323
  %v353 = vsub.f32 %v167, %v328
  %v354 = vsub.f32 %v186, %v333
  %v355 = vsub.f32 %v205, %v338
  %v356 = vsub.f32 %v224, %v343
  %v357 = vsub.f32 %v243, %v348
  %v358 = vmul.f32 %v350, 1.442695
  %v359 = vpow.pop %v358
  %v360 = vmul.f32 %v351, 1.442695
  %v361 = vpow.pop %v360
  %v362 = vmul.f32 %v352, 1.442695
  %v363 = vpow.pop %v362
  %v364 = vmul.f32 %v353, 1.442695
  %v365 = vpow.pop %v364
  %v366 = vmul.f32 %v354, 1.442695
  %v367 = vpow.pop %v366
  %v368 = vmul.f32 %v355, 1.442695
  %v369 = vpow.pop %v368
  %v370 = vmul.f32 %v356, 1.442695
  %v371 = vpow.pop %v370
  %v372 = vmul.f32 %v357, 1.442695
  %v373 = vpow.pop %v372
  %v374 = vld [vmem:[#allocation3] sm:$0xff]
  %v375 = vld [vmem:[#allocation3 + $0x8] sm:$0xff]
  %v376 = vld [vmem:[#allocation3 + $0x10] sm:$0xff]
  %v377 = vld [vmem:[#allocation3 + $0x18] sm:$0xff]
  %v378 = vld [vmem:[#allocation3 + $0x20] sm:$0xff]
  %v379 = vld [vmem:[#allocation3 + $0x28] sm:$0xff]
  %v380 = vld [vmem:[#allocation3 + $0x30] sm:$0xff]
  %v381 = vld [vmem:[#allocation3 + $0x38] sm:$0xff]
  %v382 = vmul.f32 %v295, %v374
  %v383 = vmul.f32 %v297, %v375
  %v384 = vmul.f32 %v299, %v376
  %v385 = vmul.f32 %v301, %v377
  %v386 = vmul.f32 %v303, %v378
  %v387 = vmul.f32 %v305, %v379
  %v388 = vmul.f32 %v307, %v380
  %v389 = vmul.f32 %v309, %v381
  %v390 = vsel %vm93, %v359, 0.0
  %391 = vadd.xlane.f32.xlu0 %v390
  %v392 = vpop.xlane.xlu0 %391
  %v393 = vsel %vm93, %v361, 0.0
  %394 = vadd.xlane.f32.xlu0 %v393
  %v395 = vpop.xlane.xlu0 %394
  %v396 = vsel %vm93, %v363, 0.0
  %397 = vadd.xlane.f32.xlu0 %v396
  %v398 = vpop.xlane.xlu0 %397
  %v399 = vsel %vm93, %v365, 0.0
  %400 = vadd.xlane.f32.xlu0 %v399
  %v401 = vpop.xlane.xlu0 %400
  %v402 = vsel %vm93, %v367, 0.0
  %403 = vadd.xlane.f32.xlu0 %v402
  %v404 = vpop.xlane.xlu0 %403
  %v405 = vsel %vm93, %v369, 0.0
  %406 = vadd.xlane.f32.xlu0 %v405
  %v407 = vpop.xlane.xlu0 %406
  %v408 = vsel %vm93, %v371, 0.0
  %409 = vadd.xlane.f32.xlu0 %v408
  %v410 = vpop.xlane.xlu0 %409
  %v411 = vsel %vm93, %v373, 0.0
  %412 = vadd.xlane.f32.xlu0 %v411
  %v413 = vpop.xlane.xlu0 %412
  %v414 = vadd.f32 %v382, %v392
  %v415 = vadd.f32 %v383, %v395
  %v416 = vadd.f32 %v384, %v398
  %v417 = vadd.f32 %v385, %v401
  %v418 = vadd.f32 %v386, %v404
  %v419 = vadd.f32 %v387, %v407
  %v420 = vadd.f32 %v388, %v410
  %v421 = vadd.f32 %v389, %v413
  %vm422 = vcmask 7168
  %423 = vst.msk [vmem:[#allocation3] sm:$0xff] %vm422, %v414
  %424 = vst.msk [vmem:[#allocation3 + $0x8] sm:$0xff] %vm422, %v415
  %425 = vst.msk [vmem:[#allocation3 + $0x10] sm:$0xff] %vm422, %v416
  %426 = vst.msk [vmem:[#allocation3 + $0x18] sm:$0xff] %vm422, %v417
  %427 = vst.msk [vmem:[#allocation3 + $0x20] sm:$0xff] %vm422, %v418
  %428 = vst.msk [vmem:[#allocation3 + $0x28] sm:$0xff] %vm422, %v419
  %429 = vst.msk [vmem:[#allocation3 + $0x30] sm:$0xff] %vm422, %v420
  %430 = vst.msk [vmem:[#allocation3 + $0x38] sm:$0xff] %vm422, %v421
  %v431 = vld [vmem:[#allocation4] sm:$0xff]
  %v432 = vld [vmem:[#allocation4 + $0x8] sm:$0xff]
  %v433 = vld [vmem:[#allocation4 + $0x10] sm:$0xff]
  %v434 = vld [vmem:[#allocation4 + $0x18] sm:$0xff]
  %v435 = vld [vmem:[#allocation4 + $0x20] sm:$0xff]
  %v436 = vld [vmem:[#allocation4 + $0x28] sm:$0xff]
  %v437 = vld [vmem:[#allocation4 + $0x30] sm:$0xff]
  %v438 = vld [vmem:[#allocation4 + $0x38] sm:$0xff]
  %440 = vset.pattern.permute.xlu0 0
  %441 = vperm.xlu0 %440, %v295
  %v442 = vpop.permute.xlu0 %441
  %445 = vset.pattern.permute.xlu0 0
  %446 = vperm.xlu0 %445, %v297
  %v447 = vpop.permute.xlu0 %446
  %450 = vset.pattern.permute.xlu0 0
  %451 = vperm.xlu0 %450, %v299
  %v452 = vpop.permute.xlu0 %451
  %455 = vset.pattern.permute.xlu0 0
  %456 = vperm.xlu0 %455, %v301
  %v457 = vpop.permute.xlu0 %456
  %460 = vset.pattern.permute.xlu0 0
  %461 = vperm.xlu0 %460, %v303
  %v462 = vpop.permute.xlu0 %461
  %465 = vset.pattern.permute.xlu0 0
  %466 = vperm.xlu0 %465, %v305
  %v467 = vpop.permute.xlu0 %466
  %470 = vset.pattern.permute.xlu0 0
  %471 = vperm.xlu0 %470, %v307
  %v472 = vpop.permute.xlu0 %471
  %475 = vset.pattern.permute.xlu0 0
  %476 = vperm.xlu0 %475, %v309
  %v477 = vpop.permute.xlu0 %476
  %v479 = vmul.f32 %v442, %v431
  %v480 = vmul.f32 %v447, %v432
  %v481 = vmul.f32 %v452, %v433
  %v482 = vmul.f32 %v457, %v434
  %v483 = vmul.f32 %v462, %v435
  %v484 = vmul.f32 %v467, %v436
  %v485 = vmul.f32 %v472, %v437
  %v486 = vmul.f32 %v477, %v438
  %v487 = vpack.c.bf16 %v359, %v359
  %v488 = vpack.c.bf16 %v361, %v361
  %v489 = vpack.c.bf16 %v363, %v363
  %v490 = vpack.c.bf16 %v365, %v365
  %v491 = vpack.c.bf16 %v367, %v367
  %v492 = vpack.c.bf16 %v369, %v369
  %v493 = vpack.c.bf16 %v371, %v371
  %v494 = vpack.c.bf16 %v373, %v373
  %v496 = vsel %vm93, %v487, 0
  %vm498 = vcmask 1043456
  %v500 = vsel %vm498, %v85, 0
  %502 = vmatpush.bf16.msra.mxu0 0
  %503 = vmatpush.bf16.msra.mxu0 0
  %504 = vmatpush.bf16.msra.mxu0 0
  %505 = vmatpush.bf16.msra.mxu0 0
  %506 = vmatpush.bf16.msra.mxu0 0
  %507 = vmatpush.bf16.msra.mxu0 0
  %508 = vmatpush.bf16.msra.mxu0 0
  %509 = vmatpush.bf16.msra.mxu0 %v500
  %510 = vmatmul.bf16.gmra.mxu0 %v496
  %v511 = vpop.f32.mrf.mxu0
  %v512 = vadd.f32 0.0, %v511
  %v513 = vpop.f32.mrf.mxu0
  %514 = vdwg.mxu0
  %v516 = vsel %vm93, %v488, 0
  %v519 = vsel %vm498, %v86, 0
  %521 = vmatpush.bf16.msra.mxu0 0
  %522 = vmatpush.bf16.msra.mxu0 0
  %523 = vmatpush.bf16.msra.mxu0 0
  %524 = vmatpush.bf16.msra.mxu0 0
  %525 = vmatpush.bf16.msra.mxu0 0
  %526 = vmatpush.bf16.msra.mxu0 0
  %527 = vmatpush.bf16.msra.mxu0 0
  %528 = vmatpush.bf16.msra.mxu0 %v519
  %529 = vmatmul.bf16.gmra.mxu0 %v516
  %v530 = vpop.f32.mrf.mxu0
  %v531 = vadd.f32 0.0, %v530
  %v532 = vpop.f32.mrf.mxu0
  %533 = vdwg.mxu0
  %v535 = vsel %vm93, %v489, 0
  %v538 = vsel %vm498, %v87, 0
  %540 = vmatpush.bf16.msra.mxu0 0
  %541 = vmatpush.bf16.msra.mxu0 0
  %542 = vmatpush.bf16.msra.mxu0 0
  %543 = vmatpush.bf16.msra.mxu0 0
  %544 = vmatpush.bf16.msra.mxu0 0
  %545 = vmatpush.bf16.msra.mxu0 0
  %546 = vmatpush.bf16.msra.mxu0 0
  %547 = vmatpush.bf16.msra.mxu0 %v538
  %548 = vmatmul.bf16.gmra.mxu0 %v535
  %v549 = vpop.f32.mrf.mxu0
  %v550 = vadd.f32 0.0, %v549
  %v551 = vpop.f32.mrf.mxu0
  %552 = vdwg.mxu0
  %v554 = vsel %vm93, %v490, 0
  %v557 = vsel %vm498, %v88, 0
  %559 = vmatpush.bf16.msra.mxu0 0
  %560 = vmatpush.bf16.msra.mxu0 0
  %561 = vmatpush.bf16.msra.mxu0 0
  %562 = vmatpush.bf16.msra.mxu0 0
  %563 = vmatpush.bf16.msra.mxu0 0
  %564 = vmatpush.bf16.msra.mxu0 0
  %565 = vmatpush.bf16.msra.mxu0 0
  %566 = vmatpush.bf16.msra.mxu0 %v557
  %567 = vmatmul.bf16.gmra.mxu0 %v554
  %v568 = vpop.f32.mrf.mxu0
  %v569 = vadd.f32 0.0, %v568
  %v570 = vpop.f32.mrf.mxu0
  %571 = vdwg.mxu0
  %v573 = vsel %vm93, %v491, 0
  %v576 = vsel %vm498, %v89, 0
  %578 = vmatpush.bf16.msra.mxu0 0
  %579 = vmatpush.bf16.msra.mxu0 0
  %580 = vmatpush.bf16.msra.mxu0 0
  %581 = vmatpush.bf16.msra.mxu0 0
  %582 = vmatpush.bf16.msra.mxu0 0
  %583 = vmatpush.bf16.msra.mxu0 0
  %584 = vmatpush.bf16.msra.mxu0 0
  %585 = vmatpush.bf16.msra.mxu0 %v576
  %586 = vmatmul.bf16.gmra.mxu0 %v573
  %v587 = vpop.f32.mrf.mxu0
  %v588 = vadd.f32 0.0, %v587
  %v589 = vpop.f32.mrf.mxu0
  %590 = vdwg.mxu0
  %v592 = vsel %vm93, %v492, 0
  %v595 = vsel %vm498, %v90, 0
  %597 = vmatpush.bf16.msra.mxu0 0
  %598 = vmatpush.bf16.msra.mxu0 0
  %599 = vmatpush.bf16.msra.mxu0 0
  %600 = vmatpush.bf16.msra.mxu0 0
  %601 = vmatpush.bf16.msra.mxu0 0
  %602 = vmatpush.bf16.msra.mxu0 0
  %603 = vmatpush.bf16.msra.mxu0 0
  %604 = vmatpush.bf16.msra.mxu0 %v595
  %605 = vmatmul.bf16.gmra.mxu0 %v592
  %v606 = vpop.f32.mrf.mxu0
  %v607 = vadd.f32 0.0, %v606
  %v608 = vpop.f32.mrf.mxu0
  %609 = vdwg.mxu0
  %v611 = vsel %vm93, %v493, 0
  %v614 = vsel %vm498, %v91, 0
  %616 = vmatpush.bf16.msra.mxu0 0
  %617 = vmatpush.bf16.msra.mxu0 0
  %618 = vmatpush.bf16.msra.mxu0 0
  %619 = vmatpush.bf16.msra.mxu0 0
  %620 = vmatpush.bf16.msra.mxu0 0
  %621 = vmatpush.bf16.msra.mxu0 0
  %622 = vmatpush.bf16.msra.mxu0 0
  %623 = vmatpush.bf16.msra.mxu0 %v614
  %624 = vmatmul.bf16.gmra.mxu0 %v611
  %v625 = vpop.f32.mrf.mxu0
  %v626 = vadd.f32 0.0, %v625
  %v627 = vpop.f32.mrf.mxu0
  %628 = vdwg.mxu0
  %v630 = vsel %vm93, %v494, 0
  %v633 = vsel %vm498, %v92, 0
  %635 = vmatpush.bf16.msra.mxu0 0
  %636 = vmatpush.bf16.msra.mxu0 0
  %637 = vmatpush.bf16.msra.mxu0 0
  %638 = vmatpush.bf16.msra.mxu0 0
  %639 = vmatpush.bf16.msra.mxu0 0
  %640 = vmatpush.bf16.msra.mxu0 0
  %641 = vmatpush.bf16.msra.mxu0 0
  %642 = vmatpush.bf16.msra.mxu0 %v633
  %643 = vmatmul.bf16.gmra.mxu0 %v630
  %v644 = vpop.f32.mrf.mxu0
  %v645 = vadd.f32 0.0, %v644
  %v646 = vpop.f32.mrf.mxu0
  %647 = vdwg.mxu0
  %v648 = vadd.f32 %v479, %v512
  %v649 = vadd.f32 %v480, %v531
  %v650 = vadd.f32 %v481, %v550
  %v651 = vadd.f32 %v482, %v569
  %v652 = vadd.f32 %v483, %v588
  %v653 = vadd.f32 %v484, %v607
  %v654 = vadd.f32 %v485, %v626
  %v655 = vadd.f32 %v486, %v645
  %656 = vst.msk [vmem:[#allocation4] sm:$0xff] %vm93, %v648
  %657 = vst.msk [vmem:[#allocation4 + $0x8] sm:$0xff] %vm93, %v649
  %658 = vst.msk [vmem:[#allocation4 + $0x10] sm:$0xff] %vm93, %v650
  %659 = vst.msk [vmem:[#allocation4 + $0x18] sm:$0xff] %vm93, %v651
  %660 = vst.msk [vmem:[#allocation4 + $0x20] sm:$0xff] %vm93, %v652
  %661 = vst.msk [vmem:[#allocation4 + $0x28] sm:$0xff] %vm93, %v653
  %662 = vst.msk [vmem:[#allocation4 + $0x30] sm:$0xff] %vm93, %v654
  %663 = vst.msk [vmem:[#allocation4 + $0x38] sm:$0xff] %vm93, %v655
  %664 = vst.msk [vmem:[#allocation2] sm:$0xff] %vm422, %v278
  %665 = vst.msk [vmem:[#allocation2 + $0x8] sm:$0xff] %vm422, %v279
  %666 = vst.msk [vmem:[#allocation2 + $0x10] sm:$0xff] %vm422, %v280
  %667 = vst.msk [vmem:[#allocation2 + $0x18] sm:$0xff] %vm422, %v281
  %668 = vst.msk [vmem:[#allocation2 + $0x20] sm:$0xff] %vm422, %v282
  %669 = vst.msk [vmem:[#allocation2 + $0x28] sm:$0xff] %vm422, %v283
  %670 = vst.msk [vmem:[#allocation2 + $0x30] sm:$0xff] %vm422, %v284
  %671 = vst.msk [vmem:[#allocation2 + $0x38] sm:$0xff] %vm422, %v285
  // Predicated region
  $region18: #{multi_head_attention.4} parent=0 // pred_check
    %p672 = pneg %p15
  $region19: #{multi_head_attention.4} parent=0 // pred_check_branch
    %674 = sbr.rel (%p672) target = $region21
  $region20: #{multi_head_attention.4} parent=0 // pred_region
    %v675 = vld [vmem:[#allocation3] sm:$0xff]
    %v676 = vld [vmem:[#allocation3 + $0x8] sm:$0xff]
    %v677 = vld [vmem:[#allocation3 + $0x10] sm:$0xff]
    %v678 = vld [vmem:[#allocation3 + $0x18] sm:$0xff]
    %v679 = vld [vmem:[#allocation3 + $0x20] sm:$0xff]
    %v680 = vld [vmem:[#allocation3 + $0x28] sm:$0xff]
    %v681 = vld [vmem:[#allocation3 + $0x30] sm:$0xff]
    %v682 = vld [vmem:[#allocation3 + $0x38] sm:$0xff]
    %v683 = vrcp.pop %v675
    %v684 = vrcp.pop %v676
    %v685 = vrcp.pop %v677
    %v686 = vrcp.pop %v678
    %v687 = vrcp.pop %v679
    %v688 = vrcp.pop %v680
    %v689 = vrcp.pop %v681
    %v690 = vrcp.pop %v682
    %v691 = vld [vmem:[#allocation4] sm:$0xff]
    %v692 = vld [vmem:[#allocation4 + $0x8] sm:$0xff]
    %v693 = vld [vmem:[#allocation4 + $0x10] sm:$0xff]
    %v694 = vld [vmem:[#allocation4 + $0x18] sm:$0xff]
    %v695 = vld [vmem:[#allocation4 + $0x20] sm:$0xff]
    %v696 = vld [vmem:[#allocation4 + $0x28] sm:$0xff]
    %v697 = vld [vmem:[#allocation4 + $0x30] sm:$0xff]
    %v698 = vld [vmem:[#allocation4 + $0x38] sm:$0xff]
    %700 = vset.pattern.permute.xlu0 0
    %701 = vperm.xlu0 %700, %v683
    %v702 = vpop.permute.xlu0 %701
    %705 = vset.pattern.permute.xlu0 0
    %706 = vperm.xlu0 %705, %v684
    %v707 = vpop.permute.xlu0 %706
    %710 = vset.pattern.permute.xlu0 0
    %711 = vperm.xlu0 %710, %v685
    %v712 = vpop.permute.xlu0 %711
    %715 = vset.pattern.permute.xlu0 0
    %716 = vperm.xlu0 %715, %v686
    %v717 = vpop.permute.xlu0 %716
    %720 = vset.pattern.permute.xlu0 0
    %721 = vperm.xlu0 %720, %v687
    %v722 = vpop.permute.xlu0 %721
    %725 = vset.pattern.permute.xlu0 0
    %726 = vperm.xlu0 %725, %v688
    %v727 = vpop.permute.xlu0 %726
    %730 = vset.pattern.permute.xlu0 0
    %731 = vperm.xlu0 %730, %v689
    %v732 = vpop.permute.xlu0 %731
    %735 = vset.pattern.permute.xlu0 0
    %736 = vperm.xlu0 %735, %v690
    %v737 = vpop.permute.xlu0 %736
    %v739 = vmul.f32 %v691, %v702
    %v740 = vmul.f32 %v692, %v707
    %v741 = vmul.f32 %v693, %v712
    %v742 = vmul.f32 %v694, %v717
    %v743 = vmul.f32 %v695, %v722
    %v744 = vmul.f32 %v696, %v727
    %v745 = vmul.f32 %v697, %v732
    %v746 = vmul.f32 %v698, %v737
    %v747 = vpack.c.bf16 %v739, %v739
    %v748 = vpack.c.bf16 %v740, %v740
    %v749 = vpack.c.bf16 %v741, %v741
    %v750 = vpack.c.bf16 %v742, %v742
    %v751 = vpack.c.bf16 %v743, %v743
    %v752 = vpack.c.bf16 %v744, %v744
    %v753 = vpack.c.bf16 %v745, %v745
    %v754 = vpack.c.bf16 %v746, %v746
    %vm755 = vcmask 60416
    %756 = vst.msk [vmem:[%s3] sm:$0xf] %vm755, %v747
    %757 = vst.msk [vmem:[%s3 + $0x4] sm:$0xf] %vm755, %v748
    %758 = vst.msk [vmem:[%s3 + $0x8] sm:$0xf] %vm755, %v749
    %759 = vst.msk [vmem:[%s3 + $0xc] sm:$0xf] %vm755, %v750
    %760 = vst.msk [vmem:[%s3 + $0x10] sm:$0xf] %vm755, %v751
    %761 = vst.msk [vmem:[%s3 + $0x14] sm:$0xf] %vm755, %v752
    %762 = vst.msk [vmem:[%s3 + $0x18] sm:$0xf] %vm755, %v753
    %763 = vst.msk [vmem:[%s3 + $0x1c] sm:$0xf] %vm755, %v754
  $region21: #{multi_head_attention.4} parent=0 // pred_fallthru
    _
  // Predicated region
  $region22: #{multi_head_attention.4} parent=0 // pred_check
    _
  $region23: #{multi_head_attention.4} parent=0 // pred_check_branch
    %765 = sbr.rel (0) target = $region25
  $region24: #{multi_head_attention.4} parent=0 // pred_region
    _
  $region25: #{multi_head_attention.4} parent=0 // pred_fallthru
    _
  // Predicated region
  $region26: #{multi_head_attention.4} parent=0 // pred_check
    _
  $region27: #{multi_head_attention.4} parent=0 // pred_check_branch
    %767 = sbr.rel (0) target = $region29
  $region28: #{multi_head_attention.4} parent=0 // pred_region
    _
  $region29: #{multi_head_attention.4} parent=0 // pred_fallthru
    _

</llo_original>
